<compile_context>
chip_gen: v6e
topology: v6e:2x2x1
jax: 0.10.0
libtpu: 0.0.40
codegen_flags: <defaults>
</compile_context>

<pallas_src>
import math
from functools import partial

import jax
import jax.numpy as jnp
import numpy as np
from jax.experimental import pallas as pl
from jax.experimental.pallas import tpu as pltpu

NORM_PPF_0_75 = 0.6745


def weight_init_basis(nbits: int, n: int) -> jnp.ndarray:
    base = NORM_PPF_0_75 * (2.0 / n) ** 0.5 / 2 ** (nbits - 1)
    return jnp.asarray([base * 2.0 ** i for i in range(nbits)], dtype=jnp.float32)


def make_qlevels(nbits: int, basis: jnp.ndarray):
    """qlevels = sort(encodings @ basis); thresholds = midpoints between levels."""
    bitvecs = np.unpackbits(
        np.arange(2 ** nbits, dtype=np.uint8).reshape(-1, 1), axis=1
    )[:, -nbits:]
    encodings = jnp.asarray(bitvecs.astype(np.float32) * 2.0 - 1.0)  # (+/-1)
    qlevels = jnp.sort(encodings @ basis)                    # [2**nbits]
    thresholds = 0.5 * (qlevels[:-1] + qlevels[1:])          # [2**nbits - 1]
    return qlevels, thresholds


def quantize_weight(weight, qlevels, thresholds, dtype=None):
    """Pure-JAX nearest-level quantization (same `w > thres` rule as the kernel).

    For frozen-weight inference call this ONCE, cache the result (ideally in
    bf16), and pass it to `lq_linear(..., weight_is_quantized=True)` so the
    kernel streams Wq directly instead of re-quantizing f32 W every forward.
    """
    idx = jnp.sum(weight[..., None] > thresholds, axis=-1)
    wq = qlevels[idx]
    return wq.astype(dtype) if dtype is not None else wq


def _round_up(v: int, m: int) -> int:
    return ((v + m - 1) // m) * m


def _lq_linear_kernel(qlev_ref, thr_ref, x_ref, w_ref, b_ref, o_ref, acc_ref,
                      *, nlevels, matmul_dtype, quantize_in_kernel):
    k = pl.program_id(2)

    @pl.when(k == 0)
    def _():
        acc_ref[...] = jnp.zeros_like(acc_ref)

    w = w_ref[...]                                  # (tn, tk) block of W[out, in]
    if quantize_in_kernel:
        # Quantize this weight block to the nearest level (midpoint thresholds).
        # SMEM scalars hoisted once; compares stay f32 so level decisions
        # bit-match the torch reference.
        qlev = [qlev_ref[i] for i in range(nlevels)]
        thr = [thr_ref[i] for i in range(nlevels - 1)]
        wq = jnp.full_like(w, qlev[0])
        for i in range(1, nlevels):                 # nlevels is tiny (2**nbits)
            wq = jnp.where(w > thr[i - 1], qlev[i], wq)
    else:
        wq = w                                      # already-quantized (e.g. bf16) W

    xb = x_ref[...]
    if matmul_dtype is not None:
        xb = xb.astype(matmul_dtype)
        wq = wq.astype(matmul_dtype)

    # y_block += x_block @ Wq_block.T on the MXU; transpose folded into the
    # contraction (dim 1 of x with dim 1 of Wq) — no XLU transpose.
    acc_ref[...] += jax.lax.dot_general(
        xb, wq,
        dimension_numbers=(((1,), (1,)), ((), ())),
        preferred_element_type=jnp.float32)

    @pl.when(k == pl.num_programs(2) - 1)
    def _():
        o_ref[...] = (acc_ref[...] + b_ref[...].astype(jnp.float32)).astype(o_ref.dtype)


def lq_linear(x, weight, bias, qlevels, thresholds, *,
              weight_is_quantized=False,
              tm=512, tn=None, tk=None,
              matmul_dtype=jnp.bfloat16, out_dtype=None,
              w_buffers=2):
    """Forward of LQLinear.

    weight_is_quantized=False: `weight` is the raw f32 weight; it is quantized
        inside the kernel (exact original semantics).
    weight_is_quantized=True:  `weight` is an already-quantized Wq (e.g. from
        quantize_weight(..., dtype=bf16)); the kernel streams it directly.
    matmul_dtype=None keeps the MXU contraction in f32 (bit-matches torch).
    """
    B, K = x.shape
    N, Kw = weight.shape
    assert K == Kw, "x / weight in_features mismatch"
    out_dtype = out_dtype or x.dtype
    nlevels = int(qlevels.shape[0])

    # --- generation-aware tile defaults (128 MiB VMEM parts get bigger tiles).
    try:
        vmem_cap = int(pltpu.get_tpu_info().vmem_capacity_bytes)
    except Exception:  # pragma: no cover - conservative fallback (v7x-sized)
        vmem_cap = 64 << 20
    big_vmem = vmem_cap >= (100 << 20)
    if tn is None:
        tn = 1024 if big_vmem else 512
    if tk is None:
        tk = 1024 if big_vmem else 512

    # --- tile selection.  tm is a multiple of 16 for bf16 sublane packing
    #     (8 otherwise), capped at `tm`; N / K tiles clamped to padded extents.
    sublane = 16 if matmul_dtype == jnp.bfloat16 else 8
    tm = min(_round_up(B, sublane), tm)
    tn = min(tn, _round_up(N, 128))
    tk = min(tk, _round_up(K, 128))
    # Keep >= 2 N blocks when possible so the megacore-parallel j axis has
    # work for both v7x TensorCores (each then streams only its W row-panel).
    while tn > 256 and _round_up(N, tn) // tn < 2:
        tn = _round_up(tn // 2, 128)

    Bp = _round_up(B, tm)
    Np = _round_up(N, tn)
    Kp = _round_up(K, tk)

    # --- zero-pad ragged dims.  NOTE (correctness): padded K columns of a raw
    #     W quantize to a nonzero level under strict '>', so the padded x
    #     K-columns MUST be exact zeros (they are: jnp.zeros below) for the
    #     padding to be inert.  Padded output rows/cols are sliced off.
    xp = x
    if (Bp, Kp) != (B, K):
        xp = jnp.zeros((Bp, Kp), x.dtype).at[:B, :K].set(x)
    wp = weight
    if (Np, Kp) != (N, K):
        wp = jnp.zeros((Np, Kp), weight.dtype).at[:N, :K].set(weight)
    bp = bias if Np == N else jnp.zeros((Np,), bias.dtype).at[:N].set(bias)
    bias2d = bp.reshape(1, Np)

    if matmul_dtype is not None:
        xp = xp.astype(matmul_dtype)               # halves x DMA / VMEM tile
        if weight_is_quantized:
            wp = wp.astype(matmul_dtype)           # halves W DMA / VMEM tile

    # --- grid ordered (j, i, k): N axis outermost / megacore-parallel,
    #     K reduction last.
    grid = (Np // tn, Bp // tm, Kp // tk)
    if grid[0] >= 2:
        dims = ("parallel", "arbitrary", "arbitrary")
    elif grid[1] >= 2:
        dims = ("arbitrary", "parallel", "arbitrary")
    else:
        dims = ("arbitrary", "arbitrary", "arbitrary")

    # --- explicit VMEM budget: double-buffered x / W / bias / out tiles + acc,
    #     capped generation-aware at 75% of physical VMEM.
    x_elem = jnp.dtype(xp.dtype).itemsize
    w_elem = jnp.dtype(wp.dtype).itemsize
    b_elem = jnp.dtype(bias2d.dtype).itemsize
    out_elem = jnp.dtype(out_dtype).itemsize
    nbuf_w = max(2, w_buffers)
    vmem_bytes = (2 * tm * tk * x_elem            # x double buffer
                  + nbuf_w * tn * tk * w_elem     # W buffers
                  + 2 * tn * b_elem               # bias double buffer
                  + 2 * tm * tn * out_elem        # output double buffer
                  + tm * tn * 4)                  # f32 accumulator scratch
    vmem_limit = int(min(max(vmem_bytes * 1.5 + (4 << 20), 16 << 20),
                         0.75 * vmem_cap))

    w_spec_kwargs = {}
    if w_buffers > 2:
        # Deeper pipelining on the bandwidth-bound W stream (sweepable).
        w_spec_kwargs["pipeline_mode"] = pl.Buffered(w_buffers)

    out = pl.pallas_call(
        partial(_lq_linear_kernel, nlevels=nlevels, matmul_dtype=matmul_dtype,
                quantize_in_kernel=not weight_is_quantized),
        out_shape=jax.ShapeDtypeStruct((Bp, Np), out_dtype),
        grid_spec=pltpu.PrefetchScalarGridSpec(
            num_scalar_prefetch=0,
            grid=grid,
            in_specs=[
                pl.BlockSpec(memory_space=pltpu.MemorySpace.SMEM),  # qlevels
                pl.BlockSpec(memory_space=pltpu.MemorySpace.SMEM),  # thresholds
                pl.BlockSpec((tm, tk), lambda j, i, k: (i, k)),     # x   [B, K]
                pl.BlockSpec((tn, tk), lambda j, i, k: (j, k),      # W   [N, K]
                             **w_spec_kwargs),
                pl.BlockSpec((1, tn), lambda j, i, k: (0, j)),      # bias[1, N]
            ],
            out_specs=pl.BlockSpec((tm, tn), lambda j, i, k: (i, j)),
            scratch_shapes=[pltpu.VMEM((tm, tn), jnp.float32)],
        ),
        compiler_params=pltpu.CompilerParams(
            dimension_semantics=dims,
            vmem_limit_bytes=vmem_limit),
    )(qlevels, thresholds, xp, wp, bias2d)

    if (Bp, Np) != (B, N):
        out = out[:B, :N]
    return out


if __name__ == "__main__":
    nbits = 2
    batch, in_features, out_features = 8, 320, 384   # exercises B / K / N padding

    key = jax.random.PRNGKey(0)
    kx, kw, kb = jax.random.split(key, 3)

    # deterministic parameter init matching LQLinear.__init__
    x = jax.random.normal(kx, (batch, in_features), dtype=jnp.float32)
    w_std = math.sqrt(2.0 / (in_features + out_features))
    weight = w_std * jax.random.normal(kw, (out_features, in_features),
                                       dtype=jnp.float32)
    b_bound = 1.0 / math.sqrt(in_features)          # nn.Linear default bias init
    bias = jax.random.uniform(kb, (out_features,), dtype=jnp.float32,
                              minval=-b_bound, maxval=b_bound)

    basis = weight_init_basis(nbits, out_features)
    qlevels, thresholds = make_qlevels(nbits, basis)

    # pure-JAX reference of the same forward semantics
    wq_ref = quantize_weight(weight, qlevels, thresholds)
    y_ref = jnp.dot(x, wq_ref.T, precision=jax.lax.Precision.HIGHEST) + bias

    # 1) exact path: in-kernel f32 quantize + f32 MXU (matches torch forward)
    y_exact = jax.block_until_ready(
        lq_linear(x, weight, bias, qlevels, thresholds, matmul_dtype=None))
    np.testing.assert_allclose(np.asarray(y_exact), np.asarray(y_ref),
                               rtol=1e-4, atol=1e-4)

    # 2) fast inference path: Wq precomputed once, streamed as bf16,
    #    bf16 MXU contraction with f32 accumulation (default matmul_dtype).
    wq_bf16 = quantize_weight(weight, qlevels, thresholds, dtype=jnp.bfloat16)
    y_fast = jax.block_until_ready(
        lq_linear(x, wq_bf16, bias, qlevels, thresholds,
                  weight_is_quantized=True))
    np.testing.assert_allclose(np.asarray(y_fast), np.asarray(y_ref),
                               rtol=5e-2, atol=5e-2)

    print("KERNEL_OK")
</pallas_src>

<mosaic_0001>
module attributes {stable_mosaic.version = 11 : i64} {
  func.func @_lq_linear_kernel(%arg0: i32, %arg1: i32, %arg2: i32, %arg3: memref<4xf32, #tpu.memory_space<smem>>, %arg4: memref<3xf32, #tpu.memory_space<smem>>, %arg5: memref<8x384xf32, #tpu.memory_space<vmem>>, %arg6: memref<256x384xf32, #tpu.memory_space<vmem>>, %arg7: memref<1x256xf32, #tpu.memory_space<vmem>>, %arg8: memref<8x256xf32, #tpu.memory_space<vmem>>, %arg9: memref<8x256xf32, #tpu.memory_space<vmem>>) attributes {dimension_semantics = [#tpu.dimension_semantics<parallel>, #tpu.dimension_semantics<arbitrary>, #tpu.dimension_semantics<arbitrary>], iteration_bounds = array<i64: 2, 1, 1>, scalar_prefetch = 0 : i64, scratch_operands = 1 : i64, tpu.core_type = #tpu.core_type<tc>, window_params = [{transform_indices = @transform_0, window_bounds = array<i64: 4>}, {transform_indices = @transform_1, window_bounds = array<i64: 3>}, {transform_indices = @transform_2, window_bounds = array<i64: 8, 384>}, {transform_indices = @transform_3, window_bounds = array<i64: 256, 384>}, {transform_indices = @transform_4, window_bounds = array<i64: 1, 256>}, {transform_indices = @transform_5, window_bounds = array<i64: 8, 256>}]} {
    %c0_i32 = arith.constant 0 : i32
    %0 = arith.cmpi eq, %arg2, %c0_i32 : i32
    %1 = arith.extui %0 : i1 to i32
    %c0_i32_0 = arith.constant 0 : i32
    %2 = arith.cmpi ne, %1, %c0_i32_0 : i32
    scf.if %2 {
      %cst_14 = arith.constant 0.000000e+00 : f32
      %32 = vector.broadcast %cst_14 : f32 to vector<8x256xf32>
      %c0_15 = arith.constant 0 : index
      %c0_16 = arith.constant 0 : index
      %33 = vector.load %arg9[%c0_15, %c0_16] : memref<8x256xf32, #tpu.memory_space<vmem>>, vector<8x256xf32>
      tpu.vector_store %arg9[%c0_15, %c0_16], %32 {strides = array<i32>} : memref<8x256xf32, #tpu.memory_space<vmem>>, vector<8x256xf32>,
    } else {
    }
    %c0 = arith.constant 0 : index
    %c0_1 = arith.constant 0 : index
    %3 = vector.load %arg6[%c0, %c0_1] : memref<256x384xf32, #tpu.memory_space<vmem>>, vector<256x384xf32>
    %c0_2 = arith.constant 0 : index
    %4 = memref.load %arg3[%c0_2] : memref<4xf32, #tpu.memory_space<smem>>
    %c1 = arith.constant 1 : index
    %5 = memref.load %arg3[%c1] : memref<4xf32, #tpu.memory_space<smem>>
    %c2 = arith.constant 2 : index
    %6 = memref.load %arg3[%c2] : memref<4xf32, #tpu.memory_space<smem>>
    %c3 = arith.constant 3 : index
    %7 = memref.load %arg3[%c3] : memref<4xf32, #tpu.memory_space<smem>>
    %c0_3 = arith.constant 0 : index
    %8 = memref.load %arg4[%c0_3] : memref<3xf32, #tpu.memory_space<smem>>
    %c1_4 = arith.constant 1 : index
    %9 = memref.load %arg4[%c1_4] : memref<3xf32, #tpu.memory_space<smem>>
    %c2_5 = arith.constant 2 : index
    %10 = memref.load %arg4[%c2_5] : memref<3xf32, #tpu.memory_space<smem>>
    %11 = vector.broadcast %4 : f32 to vector<256x384xf32>
    %12 = vector.broadcast %8 : f32 to vector<256x384xf32>
    %13 = arith.cmpf ogt, %3, %12 : vector<256x384xf32>
    %14 = vector.broadcast %5 : f32 to vector<256x384xf32>
    %15 = arith.select %13, %14, %11 : vector<256x384xi1>, vector<256x384xf32>
    %16 = vector.broadcast %9 : f32 to vector<256x384xf32>
    %17 = arith.cmpf ogt, %3, %16 : vector<256x384xf32>
    %18 = vector.broadcast %6 : f32 to vector<256x384xf32>
    %19 = arith.select %17, %18, %15 : vector<256x384xi1>, vector<256x384xf32>
    %20 = vector.broadcast %10 : f32 to vector<256x384xf32>
    %21 = arith.cmpf ogt, %3, %20 : vector<256x384xf32>
    %22 = vector.broadcast %7 : f32 to vector<256x384xf32>
    %23 = arith.select %21, %22, %19 : vector<256x384xi1>, vector<256x384xf32>
    %c0_6 = arith.constant 0 : index
    %c0_7 = arith.constant 0 : index
    %24 = vector.load %arg5[%c0_6, %c0_7] : memref<8x384xf32, #tpu.memory_space<vmem>>, vector<8x384xf32>
    %c0_8 = arith.constant 0 : index
    %c0_9 = arith.constant 0 : index
    %25 = vector.load %arg9[%c0_8, %c0_9] : memref<8x256xf32, #tpu.memory_space<vmem>>, vector<8x256xf32>
    %cst = arith.constant dense<0.000000e+00> : vector<8x256xf32>
    %26 = tpu.matmul %24, %23, %cst {dimension_numbers = #tpu.dot_dimension_numbers<[1], [1], [0], [0], [0, 0, 1, 0], [], []>} : vector<8x384xf32>, vector<256x384xf32>, vector<8x256xf32> -> vector<8x256xf32>
    %27 = arith.addf %25, %26 : vector<8x256xf32>
    %c0_10 = arith.constant 0 : index
    %c0_11 = arith.constant 0 : index
    %28 = vector.load %arg9[%c0_10, %c0_11] : memref<8x256xf32, #tpu.memory_space<vmem>>, vector<8x256xf32>
    tpu.vector_store %arg9[%c0_10, %c0_11], %27 {strides = array<i32>} : memref<8x256xf32, #tpu.memory_space<vmem>>, vector<8x256xf32>,
    %c0_i32_12 = arith.constant 0 : i32
    %29 = arith.cmpi eq, %arg2, %c0_i32_12 : i32
    %30 = arith.extui %29 : i1 to i32
    %c0_i32_13 = arith.constant 0 : i32
    %31 = arith.cmpi ne, %30, %c0_i32_13 : i32
    scf.if %31 {
      %c0_14 = arith.constant 0 : index
      %c0_15 = arith.constant 0 : index
      %32 = vector.load %arg9[%c0_14, %c0_15] : memref<8x256xf32, #tpu.memory_space<vmem>>, vector<8x256xf32>
      %c0_16 = arith.constant 0 : index
      %c0_17 = arith.constant 0 : index
      %33 = vector.load %arg7[%c0_16, %c0_17] : memref<1x256xf32, #tpu.memory_space<vmem>>, vector<1x256xf32>
      %34 = vector.broadcast %33 : vector<1x256xf32> to vector<8x256xf32>
      %35 = arith.addf %32, %34 : vector<8x256xf32>
      %c0_18 = arith.constant 0 : index
      %c0_19 = arith.constant 0 : index
      %36 = vector.load %arg8[%c0_18, %c0_19] : memref<8x256xf32, #tpu.memory_space<vmem>>, vector<8x256xf32>
      tpu.vector_store %arg8[%c0_18, %c0_19], %35 {strides = array<i32>} : memref<8x256xf32, #tpu.memory_space<vmem>>, vector<8x256xf32>,
    } else {
    }
    return
  }
  func.func @transform_0(%arg0: i32, %arg1: i32, %arg2: i32) -> i32 {
    %c0_i32 = arith.constant 0 : i32
    %c0_i32_0 = arith.constant 0 : i32
    return %c0_i32 : i32
  }
  func.func @transform_1(%arg0: i32, %arg1: i32, %arg2: i32) -> i32 {
    %c0_i32 = arith.constant 0 : i32
    %c0_i32_0 = arith.constant 0 : i32
    return %c0_i32 : i32
  }
  func.func @transform_2(%arg0: i32, %arg1: i32, %arg2: i32) -> (i32, i32) {
    %c0_i32 = arith.constant 0 : i32
    return %arg1, %arg2 : i32, i32
  }
  func.func @transform_3(%arg0: i32, %arg1: i32, %arg2: i32) -> (i32, i32) {
    %c0_i32 = arith.constant 0 : i32
    return %arg0, %arg2 : i32, i32
  }
  func.func @transform_4(%arg0: i32, %arg1: i32, %arg2: i32) -> (i32, i32) {
    %c0_i32 = arith.constant 0 : i32
    %c0_i32_0 = arith.constant 0 : i32
    return %c0_i32, %arg0 : i32, i32
  }
  func.func @transform_5(%arg0: i32, %arg1: i32, %arg2: i32) -> (i32, i32) {
    %c0_i32 = arith.constant 0 : i32
    return %arg1, %arg0 : i32, i32
  }
}

</mosaic_0001>

<llo_original>
// kernel: tpu_custom_call.1
$region0: #{tpu_custom_call.1}
  #allocation0 [shape = 'u32[]', space=smem, size = 0x4, offset = 0x4, fixed_abs, tag = 'smem constant byte address 0x4 - core index']
  #allocation1 [shape = 'u32[144,128]{1,0:T(1,128)}', space=vmem, size = 0x12000, scoped, tag = 'internal scratch']
  #allocation2 [shape = 'f32[8,256]{1,0:T(8,128)}', space=vmem, size = 0x2000, scoped, tag = 'scratch operand']
  %s0 = inlined_call_operand.hbm [shape: f32[4], index: 0, kind: input, shape index: {}]
  %s1 = inlined_call_operand.vmem [shape: f32[3], index: 1, kind: input, shape index: {}]
  %s2 = inlined_call_operand.hbm [shape: f32[8,384], index: 2, kind: input, shape index: {}]
  %s3 = inlined_call_operand.hbm [shape: f32[512,384], index: 3, kind: input, shape index: {}]
  %s4 = inlined_call_operand.vmem [shape: f32[1,512], index: 4, kind: input, shape index: {}]
  %s5 = inlined_call_operand.hbm [shape: f32[8,512], index: 5, kind: output, shape index: {}]
  %s6 = sld [smem:[#allocation0]]
  $region77: #{tpu_custom_call.1} parent=0
    _
  %s8 = ssub.s32 1, %s6
  %s9 = scalar_select 0, %s8, %s6
  $region1: #{tpu_custom_call.1} parent=0
    #allocation3 [shape = 'u8[512]{0}', space=smem, size = 0x200, scoped, tag = 'input window, operand 0, single buffered']
    #allocation4 [shape = 's32[2]{0}', space=sflag, size = 0x8, scoped, tag = 'scoped memory for tpu_custom_call.1']
    #allocation5 [shape = 's32[2]{0}', space=sflag, size = 0x8, scoped, tag = 'scoped memory for tpu_custom_call.1']
    #allocation6 [shape = 's32[2]{0}', space=sflag, size = 0x8, scoped, tag = 'scoped memory for tpu_custom_call.1']
    #allocation7 [shape = 's32[2]{0}', space=sflag, size = 0x8, scoped, tag = 'scoped memory for tpu_custom_call.1']
    #allocation8 [shape = 'u8[512]{0}', space=smem, size = 0x200, scoped, tag = 'input window, operand 1, single buffered']
    #allocation9 [shape = 'u8[12288]{0}', space=vmem, size = 0x3000, scoped, tag = 'input window, operand 2, single buffered']
    #allocation10 [shape = 'u8[786432]{0}', space=vmem, size = 0xc0000, scoped, tag = 'input window, operand 3']
    #allocation11 [shape = 's32[2]{0}', space=sflag, size = 0x8, scoped, tag = 'scoped memory for tpu_custom_call.1']
    #allocation12 [shape = 'u8[16384]{0}', space=vmem, size = 0x4000, scoped, tag = 'output window, operand 0']
    %10 = vsyncpa [#allocation6], 0
    %11 = vsyncpa [#allocation7], 0
    %12 = vsyncpa [#allocation4], 0
    %13 = vsyncpa [#allocation11], 0
    %s14 = scalar_lea.sflag [#allocation11], 1
    %15 = vsyncpa %s14, 0
    %16 = vsyncpa [#allocation5], 0
    %s17 = scalar_lea.sflag [#allocation5], 1
    %18 = vsyncpa %s17, 0
    loop: start=0, step=1, limit=4
    $region2: #{tpu_custom_call.1} parent=1 // loop_pre_header
      _
    $region3: #{tpu_custom_call.1} parent=1 // loop_header
      %s20 = sphi 0, %s24
      %p21 = scmp.ge.s32.totalorder %s20, 4
      %s27 = sphi 0, %s46
      %s28 = sphi 0, %s42
      %s29 = sphi 0, %s38
      %s30 = sphi 0, %s27
      %s31 = sphi 0, %s28
      %s32 = sphi 0, %s29
      %s33 = sphi 0, %s30
      %s34 = sphi 0, %s31
      %s35 = sphi 0, %s32
      %s47 = sphi 0, %s47
      %s49 = sphi 0, %s47
      %s50 = sphi 0, %s49
      %s64 = sphi 0, %s50
      %s68 = sphi 0, %s68
      %s70 = sphi 0, %s68
      %s71 = sphi 0, %s70
      %s85 = sphi 0, %s71
      %s93 = sphi 0, %s95
      %s96 = sphi 0, %s93
      %s97 = sphi 0, %s96
      %s113 = sphi 0, %s97
      %s121 = sphi 0, %s123
      %s124 = sphi 0, %s121
      %s125 = sphi 0, %s124
      %s141 = sphi 0, %s125
      %s147 = sphi 0, %s149
      %s150 = sphi 0, %s147
      %s151 = sphi 0, %s150
      %s167 = sphi 0, %s151
      %s175 = sphi 0, %s177
      %s178 = sphi 0, %s175
      %s179 = sphi 0, %s178
      %s195 = sphi 0, %s179
    $region4: #{tpu_custom_call.1} parent=1 // loop_header_branch
      %23 = sbr.rel (%p21) target = $region8
    $region5: #{tpu_custom_call.1} parent=1 // loop_body
      %s25 = ssub.s32 %s20, 1
      %s26 = ssub.s32 %s20, 2
      %s36 = sadd.s32 1, %s29
      %p37 = scmp.ge.s32.totalorder %s36, 1
      %s38 = scalar_select %p37, 0, %s36
      %s39 = sadd.s32 1, %s28
      %s40 = scalar_select %p37, %s39, %s28
      %p41 = scmp.ge.s32.totalorder %s40, 1
      %s42 = scalar_select %p41, 0, %s40
      %s43 = sadd.s32 1, %s27
      %s44 = scalar_select %p41, %s43, %s27
      %p45 = scmp.ge.s32.totalorder %s44, 2
      %s46 = scalar_select %p45, 0, %s44
      %s48 = sadd.s32 %s47, 1
      %p51 = scmp.eq.s32.totalorder %s20, 1
      %p52 = scmp.ne.s32.totalorder %s47, %s49
      %p53 = scmp.eq.s32.totalorder %s20, 0
      %p54 = por %p52, %p53
      %p55 = scmp.ne.s32.totalorder %s47, %s49
      %p56 = scmp.eq.s32.totalorder %s25, 1
      %p57 = por %p55, %p56
      %p58 = scmp.ne.s32.totalorder %s49, %s50
      %p59 = scmp.eq.s32.totalorder %s25, 0
      %p60 = por %p58, %p59
      %p61 = scmp.ne.s32.totalorder %s49, %s50
      %p62 = scmp.eq.s32.totalorder %s26, 1
      %p63 = por %p61, %p62
      %p65 = scmp.ne.s32.totalorder %s50, %s64
      %p66 = scmp.eq.s32.totalorder %s26, 0
      %p67 = por %p65, %p66
      %s69 = sadd.s32 %s68, 1
      %p72 = scmp.eq.s32.totalorder %s20, 1
      %p73 = scmp.ne.s32.totalorder %s68, %s70
      %p74 = scmp.eq.s32.totalorder %s20, 0
      %p75 = por %p73, %p74
      %p76 = scmp.ne.s32.totalorder %s68, %s70
      %p77 = scmp.eq.s32.totalorder %s25, 1
      %p78 = por %p76, %p77
      %p79 = scmp.ne.s32.totalorder %s70, %s71
      %p80 = scmp.eq.s32.totalorder %s25, 0
      %p81 = por %p79, %p80
      %p82 = scmp.ne.s32.totalorder %s70, %s71
      %p83 = scmp.eq.s32.totalorder %s26, 1
      %p84 = por %p82, %p83
      %p86 = scmp.ne.s32.totalorder %s71, %s85
      %p87 = scmp.eq.s32.totalorder %s26, 0
      %p88 = por %p86, %p87
      %s89 = ssub.s32 %s28, %s42
      %s90 = ssub.s32 %s29, %s38
      %s91 = sor.u32 %s89, %s90
      %p92 = scmp.eq.s32.totalorder %s91, 0
      %s94 = sadd.s32 %s93, 1
      %s95 = scalar_select %p92, %s93, %s94
      %p98 = pneg %p92
      %p99 = scmp.eq.s32.totalorder %s20, 1
      %p100 = por %p98, %p99
      %p101 = scmp.ne.s32.totalorder %s93, %s96
      %p102 = scmp.eq.s32.totalorder %s20, 0
      %p103 = por %p101, %p102
      %p104 = scmp.ne.s32.totalorder %s93, %s96
      %p105 = scmp.eq.s32.totalorder %s25, 1
      %p106 = por %p104, %p105
      %p107 = scmp.ne.s32.totalorder %s96, %s97
      %p108 = scmp.eq.s32.totalorder %s25, 0
      %p109 = por %p107, %p108
      %p110 = scmp.ne.s32.totalorder %s96, %s97
      %p111 = scmp.eq.s32.totalorder %s26, 1
      %p112 = por %p110, %p111
      %p114 = scmp.ne.s32.totalorder %s97, %s113
      %p115 = scmp.eq.s32.totalorder %s26, 0
      %p116 = por %p114, %p115
      %s117 = ssub.s32 %s27, %s46
      %s118 = ssub.s32 %s29, %s38
      %s119 = sor.u32 %s117, %s118
      %p120 = scmp.eq.s32.totalorder %s119, 0
      %s122 = sadd.s32 %s121, 1
      %s123 = scalar_select %p120, %s121, %s122
      %p126 = pneg %p120
      %p127 = scmp.eq.s32.totalorder %s20, 1
      %p128 = por %p126, %p127
      %p129 = scmp.ne.s32.totalorder %s121, %s124
      %p130 = scmp.eq.s32.totalorder %s20, 0
      %p131 = por %p129, %p130
      %p132 = scmp.ne.s32.totalorder %s121, %s124
      %p133 = scmp.eq.s32.totalorder %s25, 1
      %p134 = por %p132, %p133
      %p135 = scmp.ne.s32.totalorder %s124, %s125
      %p136 = scmp.eq.s32.totalorder %s25, 0
      %p137 = por %p135, %p136
      %p138 = scmp.ne.s32.totalorder %s124, %s125
      %p139 = scmp.eq.s32.totalorder %s26, 1
      %p140 = por %p138, %p139
      %p142 = scmp.ne.s32.totalorder %s125, %s141
      %p143 = scmp.eq.s32.totalorder %s26, 0
      %p144 = por %p142, %p143
      %s145 = ssub.s32 %s27, %s46
      %p146 = scmp.eq.s32.totalorder %s145, 0
      %s148 = sadd.s32 %s147, 1
      %s149 = scalar_select %p146, %s147, %s148
      %p152 = pneg %p146
      %p153 = scmp.eq.s32.totalorder %s20, 1
      %p154 = por %p152, %p153
      %p155 = scmp.ne.s32.totalorder %s147, %s150
      %p156 = scmp.eq.s32.totalorder %s20, 0
      %p157 = por %p155, %p156
      %p158 = scmp.ne.s32.totalorder %s147, %s150
      %p159 = scmp.eq.s32.totalorder %s25, 1
      %p160 = por %p158, %p159
      %p161 = scmp.ne.s32.totalorder %s150, %s151
      %p162 = scmp.eq.s32.totalorder %s25, 0
      %p163 = por %p161, %p162
      %p164 = scmp.ne.s32.totalorder %s150, %s151
      %p165 = scmp.eq.s32.totalorder %s26, 1
      %p166 = por %p164, %p165
      %p168 = scmp.ne.s32.totalorder %s151, %s167
      %p169 = scmp.eq.s32.totalorder %s26, 0
      %p170 = por %p168, %p169
      %s171 = ssub.s32 %s28, %s42
      %s172 = ssub.s32 %s27, %s46
      %s173 = sor.u32 %s171, %s172
      %p174 = scmp.eq.s32.totalorder %s173, 0
      %s176 = sadd.s32 %s175, 1
      %s177 = scalar_select %p174, %s175, %s176
      %p180 = pneg %p174
      %p181 = scmp.eq.s32.totalorder %s20, 1
      %p182 = por %p180, %p181
      %p183 = scmp.ne.s32.totalorder %s175, %s178
      %p184 = scmp.eq.s32.totalorder %s20, 0
      %p185 = por %p183, %p184
      %p186 = scmp.ne.s32.totalorder %s175, %s178
      %p187 = scmp.eq.s32.totalorder %s25, 1
      %p188 = por %p186, %p187
      %p189 = scmp.ne.s32.totalorder %s178, %s179
      %p190 = scmp.eq.s32.totalorder %s25, 0
      %p191 = por %p189, %p190
      %p192 = scmp.ne.s32.totalorder %s178, %s179
      %p193 = scmp.eq.s32.totalorder %s26, 1
      %p194 = por %p192, %p193
      %p196 = scmp.ne.s32.totalorder %s179, %s195
      %p197 = scmp.eq.s32.totalorder %s26, 0
      %p198 = por %p196, %p197
      %p199 = scmp.le.s32.totalorder 1, %s20
      %p200 = scmp.lt.s32.totalorder %s20, 3
      %p201 = pnand %p199, %p200
      %p202 = pneg %p201
      // Predicated region
      $region9: #{tpu_custom_call.1} parent=5 // pred_check
        _
      $region10: #{tpu_custom_call.1} parent=5 // pred_check_branch
        %204 = sbr.rel (%p201) target = $region12
      $region11: #{tpu_custom_call.1} parent=5 // pred_region
        %s205 = ssub.s32 %s20, 1
        // Predicated region
        $region13: #{tpu_custom_call.1} parent=11 // pred_check
          %p206 = pneg %p60
        $region14: #{tpu_custom_call.1} parent=11 // pred_check_branch
          %208 = sbr.rel (%p206) target = $region16
        $region15: #{tpu_custom_call.1} parent=11 // pred_region
          %s210 = ssub.s32 16, 16
          %211 = vsyncadd [#allocation6], %s210
          %214 = dma.hbm_to_smem %s0, 16, [#allocation3], [#allocation6]
        $region16: #{tpu_custom_call.1} parent=11 // pred_fallthru
          _
        // Predicated region
        $region17: #{tpu_custom_call.1} parent=11 // pred_check
          %p215 = pneg %p81
        $region18: #{tpu_custom_call.1} parent=11 // pred_check_branch
          %217 = sbr.rel (%p215) target = $region20
        $region19: #{tpu_custom_call.1} parent=11 // pred_region
          %s219 = ssub.s32 16, 16
          %220 = vsyncadd [#allocation7], %s219
          %s222 = sshll.u32 %s1, 4
          %s223 = int_to_ptr.vmem [resolvable:$true] %s222
          %225 = dma.vmem_to_smem %s223, 16, [#allocation8], [#allocation7]
        $region20: #{tpu_custom_call.1} parent=11 // pred_fallthru
          _
        // Predicated region
        $region21: #{tpu_custom_call.1} parent=11 // pred_check
          %p226 = pneg %p109
        $region22: #{tpu_custom_call.1} parent=11 // pred_check_branch
          %228 = sbr.rel (%p226) target = $region24
        $region23: #{tpu_custom_call.1} parent=11 // pred_region
          %s229 = smul.u32 3, %s32
          %s231 = ssub.s32 384, 384
          %232 = vsyncadd [#allocation4], %s231
          %s233 = smul.addr %s31, 3
          %s234 = sadd.s32 %s229, %s233
          %s235 = smul.addr %s234, 128
          %s236 = scalar_lea.hbm %s2, %s235
          %s238 = sshll.u32 [#allocation9], 4
          %s239 = int_to_ptr.vmem [resolvable:$true] %s238
          %241 = dma.hbm_to_vmem [thread:$0]  %s236, 384, %s239, [#allocation4]
        $region24: #{tpu_custom_call.1} parent=11 // pred_fallthru
          _
      $region12: #{tpu_custom_call.1} parent=5 // pred_fallthru
        _
      %p242 = scmp.lt.s32.totalorder %s20, 2
      // Predicated region
      $region25: #{tpu_custom_call.1} parent=5 // pred_check
        %p243 = pneg %p242
      $region26: #{tpu_custom_call.1} parent=5 // pred_check_branch
        %245 = sbr.rel (%p243) target = $region28
      $region27: #{tpu_custom_call.1} parent=5 // pred_region
        // Predicated region
        $region29: #{tpu_custom_call.1} parent=27 // pred_check
          %p246 = pneg %p131
        $region30: #{tpu_custom_call.1} parent=27 // pred_check_branch
          %248 = sbr.rel (%p246) target = $region32
        $region31: #{tpu_custom_call.1} parent=27 // pred_region
          %s249 = sand.u32 %s121, 1
          %s250 = scalar_lea.sflag [#allocation11], %s249
          %s251 = sand.u32 %s121, 1
          %s252 = smul.addr %s251, 768
          %s253 = scalar_lea.vmem [#allocation10], %s252
          %s254 = smul.u32 32, %s27
          %s255 = smul.u32 3, %s29
          %s257 = ssub.s32 12288, 12288
          %258 = vsyncadd %s250, %s257
          %s259 = smul.addr %s254, 3
          %s260 = sadd.s32 %s255, %s259
          %s261 = smul.addr %s260, 128
          %s262 = scalar_lea.hbm %s3, %s261
          %s263 = sshll.u32 %s253, 4
          %s264 = int_to_ptr.vmem [resolvable:$true] %s263
          %269 = dma.hbm_to_vmem [thread:$0]  %s262, 12288, %s264, %s250, 384, 384, 24
        $region32: #{tpu_custom_call.1} parent=27 // pred_fallthru
          _
        // Predicated region
        $region33: #{tpu_custom_call.1} parent=27 // pred_check
          %p270 = pneg %p157
        $region34: #{tpu_custom_call.1} parent=27 // pred_check_branch
          %272 = sbr.rel (%p270) target = $region36
        $region35: #{tpu_custom_call.1} parent=27 // pred_region
          %s273 = smul.u32 2, %s27
          %p274 = scmp.lt.s32.totalorder %s273, 3
          %s275 = scalar_select %p274, %s273, 3
          %s276 = scalar_lea.vmem %s4, %s275
          %s277 = smul.u32 2, %s27
        $region36: #{tpu_custom_call.1} parent=27 // pred_fallthru
          _
      $region28: #{tpu_custom_call.1} parent=5 // pred_fallthru
        _
      %p278 = scmp.le.s32.totalorder 1, %s20
      %p279 = scmp.lt.s32.totalorder %s20, 3
      %p280 = pnand %p278, %p279
      %p281 = pneg %p280
      // Predicated region
      $region37: #{tpu_custom_call.1} parent=5 // pred_check
        _
      $region38: #{tpu_custom_call.1} parent=5 // pred_check_branch
        %283 = sbr.rel (%p280) target = $region40
      $region39: #{tpu_custom_call.1} parent=5 // pred_region
        %s284 = ssub.s32 %s20, 1
        // Predicated region
        $region41: #{tpu_custom_call.1} parent=39 // pred_check
          %p285 = pneg %p60
        $region42: #{tpu_custom_call.1} parent=39 // pred_check_branch
          %287 = sbr.rel (%p285) target = $region44
        $region43: #{tpu_custom_call.1} parent=39 // pred_region
          %288 = dma.done [#allocation6], 16
        $region44: #{tpu_custom_call.1} parent=39 // pred_fallthru
          _
        // Predicated region
        $region45: #{tpu_custom_call.1} parent=39 // pred_check
          %p289 = pneg %p81
        $region46: #{tpu_custom_call.1} parent=39 // pred_check_branch
          %291 = sbr.rel (%p289) target = $region48
        $region47: #{tpu_custom_call.1} parent=39 // pred_region
          %292 = dma.done [#allocation7], 16
        $region48: #{tpu_custom_call.1} parent=39 // pred_fallthru
          _
        // Predicated region
        $region49: #{tpu_custom_call.1} parent=39 // pred_check
          %p293 = pneg %p109
        $region50: #{tpu_custom_call.1} parent=39 // pred_check_branch
          %295 = sbr.rel (%p293) target = $region52
        $region51: #{tpu_custom_call.1} parent=39 // pred_region
          %296 = dma.done [#allocation4], 384
        $region52: #{tpu_custom_call.1} parent=39 // pred_fallthru
          _
        %s297 = sand.u32 %s124, 1
        %s298 = scalar_lea.sflag [#allocation11], %s297
        %s299 = sand.u32 %s124, 1
        %s300 = smul.addr %s299, 768
        %s301 = scalar_lea.vmem [#allocation10], %s300
        // Predicated region
        $region53: #{tpu_custom_call.1} parent=39 // pred_check
          %p302 = pneg %p137
        $region54: #{tpu_custom_call.1} parent=39 // pred_check_branch
          %304 = sbr.rel (%p302) target = $region56
        $region55: #{tpu_custom_call.1} parent=39 // pred_region
          %305 = dma.done %s298, 12288
        $region56: #{tpu_custom_call.1} parent=39 // pred_fallthru
          _
        %306 = sfence
        %p307 = pneg %p60
        %p308 = pneg %p57
        %p309 = pneg %p81
        %p310 = pneg %p78
        %p311 = pneg %p109
        %p312 = pneg %p106
        %s313 = sand.u32 %s124, 1
        %s314 = scalar_lea.sflag [#allocation11], %s313
        %s315 = sand.u32 %s124, 1
        %s316 = smul.addr %s315, 768
        %s317 = scalar_lea.vmem [#allocation10], %s316
        %p318 = pneg %p137
        %p319 = pneg %p134
        %s320 = smul.u32 2, %s30
        %p321 = scmp.lt.s32.totalorder %s320, 3
        %s322 = scalar_select %p321, %s320, 3
        %s323 = scalar_lea.vmem %s4, %s322
        %p324 = pneg %p163
        %p325 = pneg %p160
        %p326 = pneg %p191
        %p327 = pneg %p188
        %s328 = sand.u32 %s178, 1
        %s329 = scalar_lea.sflag [#allocation5], %s328
        %s330 = sand.u32 %s178, 1
        %s331 = smul.addr %s330, 16
        %s332 = scalar_lea.vmem [#allocation12], %s331
        %s333 = smul.u32 3, %s32
        %s334 = smul.u32 32, %s30
        %s335 = smul.u32 3, %s32
        %s336 = smul.u32 2, %s30
        %p337 = scmp.lt.s32.totalorder %s336, 3
        %s338 = scalar_select %p337, %s336, 3
        %s339 = scalar_lea.vmem %s4, %s338
        %s340 = smul.u32 2, %s30
        %s341 = smul.u32 2, %s30
        %p342 = scmp.eq.s32.totalorder %s32, 0
        // Predicated region
        $region57: #{tpu_custom_call.1} parent=39 // pred_check
          %p343 = pneg %p342
        $region58: #{tpu_custom_call.1} parent=39 // pred_check_branch
          %345 = sbr.rel (%p343) target = $region60
        $region59: #{tpu_custom_call.1} parent=39 // pred_region
          %346 = vst [vmem:[#allocation2] sm:$0xff] 0.0
          %347 = vst [vmem:[#allocation2 + $0x8] sm:$0xff] 0.0
        $region60: #{tpu_custom_call.1} parent=39 // pred_fallthru
          _
        %v348 = vld [vmem:[%s301] sm:$0xff]
        %v349 = vld [vmem:[%s301 + $0x8] sm:$0xff]
        %v350 = vld [vmem:[%s301 + $0x10] sm:$0xff]
        %v351 = vld [vmem:[%s301 + $0x18] sm:$0xff]
        %v352 = vld [vmem:[%s301 + $0x20] sm:$0xff]
        %v353 = vld [vmem:[%s301 + $0x28] sm:$0xff]
        %v354 = vld [vmem:[%s301 + $0x30] sm:$0xff]
        %v355 = vld [vmem:[%s301 + $0x38] sm:$0xff]
        %v356 = vld [vmem:[%s301 + $0x40] sm:$0xff]
        %v357 = vld [vmem:[%s301 + $0x48] sm:$0xff]
        %v358 = vld [vmem:[%s301 + $0x50] sm:$0xff]
        %v359 = vld [vmem:[%s301 + $0x58] sm:$0xff]
        %v360 = vld [vmem:[%s301 + $0x60] sm:$0xff]
        %v361 = vld [vmem:[%s301 + $0x68] sm:$0xff]
        %v362 = vld [vmem:[%s301 + $0x70] sm:$0xff]
        %v363 = vld [vmem:[%s301 + $0x78] sm:$0xff]
        %v364 = vld [vmem:[%s301 + $0x80] sm:$0xff]
        %v365 = vld [vmem:[%s301 + $0x88] sm:$0xff]
        %v366 = vld [vmem:[%s301 + $0x90] sm:$0xff]
        %v367 = vld [vmem:[%s301 + $0x98] sm:$0xff]
        %v368 = vld [vmem:[%s301 + $0xa0] sm:$0xff]
        %v369 = vld [vmem:[%s301 + $0xa8] sm:$0xff]
        %v370 = vld [vmem:[%s301 + $0xb0] sm:$0xff]
        %v371 = vld [vmem:[%s301 + $0xb8] sm:$0xff]
        %v372 = vld [vmem:[%s301 + $0xc0] sm:$0xff]
        %v373 = vld [vmem:[%s301 + $0xc8] sm:$0xff]
        %v374 = vld [vmem:[%s301 + $0xd0] sm:$0xff]
        %v375 = vld [vmem:[%s301 + $0xd8] sm:$0xff]
        %v376 = vld [vmem:[%s301 + $0xe0] sm:$0xff]
        %v377 = vld [vmem:[%s301 + $0xe8] sm:$0xff]
        %v378 = vld [vmem:[%s301 + $0xf0] sm:$0xff]
        %v379 = vld [vmem:[%s301 + $0xf8] sm:$0xff]
        %v380 = vld [vmem:[%s301 + $0x100] sm:$0xff]
        %v381 = vld [vmem:[%s301 + $0x108] sm:$0xff]
        %v382 = vld [vmem:[%s301 + $0x110] sm:$0xff]
        %v383 = vld [vmem:[%s301 + $0x118] sm:$0xff]
        %v384 = vld [vmem:[%s301 + $0x120] sm:$0xff]
        %v385 = vld [vmem:[%s301 + $0x128] sm:$0xff]
        %v386 = vld [vmem:[%s301 + $0x130] sm:$0xff]
        %v387 = vld [vmem:[%s301 + $0x138] sm:$0xff]
        %v388 = vld [vmem:[%s301 + $0x140] sm:$0xff]
        %v389 = vld [vmem:[%s301 + $0x148] sm:$0xff]
        %v390 = vld [vmem:[%s301 + $0x150] sm:$0xff]
        %v391 = vld [vmem:[%s301 + $0x158] sm:$0xff]
        %v392 = vld [vmem:[%s301 + $0x160] sm:$0xff]
        %v393 = vld [vmem:[%s301 + $0x168] sm:$0xff]
        %v394 = vld [vmem:[%s301 + $0x170] sm:$0xff]
        %v395 = vld [vmem:[%s301 + $0x178] sm:$0xff]
        %v396 = vld [vmem:[%s301 + $0x180] sm:$0xff]
        %v397 = vld [vmem:[%s301 + $0x188] sm:$0xff]
        %v398 = vld [vmem:[%s301 + $0x190] sm:$0xff]
        %v399 = vld [vmem:[%s301 + $0x198] sm:$0xff]
        %v400 = vld [vmem:[%s301 + $0x1a0] sm:$0xff]
        %v401 = vld [vmem:[%s301 + $0x1a8] sm:$0xff]
        %v402 = vld [vmem:[%s301 + $0x1b0] sm:$0xff]
        %v403 = vld [vmem:[%s301 + $0x1b8] sm:$0xff]
        %v404 = vld [vmem:[%s301 + $0x1c0] sm:$0xff]
        %v405 = vld [vmem:[%s301 + $0x1c8] sm:$0xff]
        %v406 = vld [vmem:[%s301 + $0x1d0] sm:$0xff]
        %v407 = vld [vmem:[%s301 + $0x1d8] sm:$0xff]
        %v408 = vld [vmem:[%s301 + $0x1e0] sm:$0xff]
        %v409 = vld [vmem:[%s301 + $0x1e8] sm:$0xff]
        %v410 = vld [vmem:[%s301 + $0x1f0] sm:$0xff]
        %v411 = vld [vmem:[%s301 + $0x1f8] sm:$0xff]
        %v412 = vld [vmem:[%s301 + $0x200] sm:$0xff]
        %v413 = vld [vmem:[%s301 + $0x208] sm:$0xff]
        %v414 = vld [vmem:[%s301 + $0x210] sm:$0xff]
        %v415 = vld [vmem:[%s301 + $0x218] sm:$0xff]
        %v416 = vld [vmem:[%s301 + $0x220] sm:$0xff]
        %v417 = vld [vmem:[%s301 + $0x228] sm:$0xff]
        %v418 = vld [vmem:[%s301 + $0x230] sm:$0xff]
        %v419 = vld [vmem:[%s301 + $0x238] sm:$0xff]
        %v420 = vld [vmem:[%s301 + $0x240] sm:$0xff]
        %v421 = vld [vmem:[%s301 + $0x248] sm:$0xff]
        %v422 = vld [vmem:[%s301 + $0x250] sm:$0xff]
        %v423 = vld [vmem:[%s301 + $0x258] sm:$0xff]
        %v424 = vld [vmem:[%s301 + $0x260] sm:$0xff]
        %v425 = vld [vmem:[%s301 + $0x268] sm:$0xff]
        %v426 = vld [vmem:[%s301 + $0x270] sm:$0xff]
        %v427 = vld [vmem:[%s301 + $0x278] sm:$0xff]
        %v428 = vld [vmem:[%s301 + $0x280] sm:$0xff]
        %v429 = vld [vmem:[%s301 + $0x288] sm:$0xff]
        %v430 = vld [vmem:[%s301 + $0x290] sm:$0xff]
        %v431 = vld [vmem:[%s301 + $0x298] sm:$0xff]
        %v432 = vld [vmem:[%s301 + $0x2a0] sm:$0xff]
        %v433 = vld [vmem:[%s301 + $0x2a8] sm:$0xff]
        %v434 = vld [vmem:[%s301 + $0x2b0] sm:$0xff]
        %v435 = vld [vmem:[%s301 + $0x2b8] sm:$0xff]
        %v436 = vld [vmem:[%s301 + $0x2c0] sm:$0xff]
        %v437 = vld [vmem:[%s301 + $0x2c8] sm:$0xff]
        %v438 = vld [vmem:[%s301 + $0x2d0] sm:$0xff]
        %v439 = vld [vmem:[%s301 + $0x2d8] sm:$0xff]
        %v440 = vld [vmem:[%s301 + $0x2e0] sm:$0xff]
        %v441 = vld [vmem:[%s301 + $0x2e8] sm:$0xff]
        %v442 = vld [vmem:[%s301 + $0x2f0] sm:$0xff]
        %v443 = vld [vmem:[%s301 + $0x2f8] sm:$0xff]
        %s444 = sld [smem:[#allocation3]]
        %s445 = sld [smem:[#allocation3 + $0x1]]
        %s446 = sld [smem:[#allocation3 + $0x2]]
        %s447 = sld [smem:[#allocation3 + $0x3]]
        %s448 = sld [smem:[#allocation8]]
        %s449 = sld [smem:[#allocation8 + $0x1]]
        %s450 = sld [smem:[#allocation8 + $0x2]]
        %v451 = vstv %s444
        %v452 = vstv %s448
        %vm453 = vcmp.gt.f32.partialorder %v348, %v452
        %vm454 = vcmp.gt.f32.partialorder %v349, %v452
        %vm455 = vcmp.gt.f32.partialorder %v350, %v452
        %vm456 = vcmp.gt.f32.partialorder %v351, %v452
        %vm457 = vcmp.gt.f32.partialorder %v352, %v452
        %vm458 = vcmp.gt.f32.partialorder %v353, %v452
        %vm459 = vcmp.gt.f32.partialorder %v354, %v452
        %vm460 = vcmp.gt.f32.partialorder %v355, %v452
        %vm461 = vcmp.gt.f32.partialorder %v356, %v452
        %vm462 = vcmp.gt.f32.partialorder %v357, %v452
        %vm463 = vcmp.gt.f32.partialorder %v358, %v452
        %vm464 = vcmp.gt.f32.partialorder %v359, %v452
        %vm465 = vcmp.gt.f32.partialorder %v360, %v452
        %vm466 = vcmp.gt.f32.partialorder %v361, %v452
        %vm467 = vcmp.gt.f32.partialorder %v362, %v452
        %vm468 = vcmp.gt.f32.partialorder %v363, %v452
        %vm469 = vcmp.gt.f32.partialorder %v364, %v452
        %vm470 = vcmp.gt.f32.partialorder %v365, %v452
        %vm471 = vcmp.gt.f32.partialorder %v366, %v452
        %vm472 = vcmp.gt.f32.partialorder %v367, %v452
        %vm473 = vcmp.gt.f32.partialorder %v368, %v452
        %vm474 = vcmp.gt.f32.partialorder %v369, %v452
        %vm475 = vcmp.gt.f32.partialorder %v370, %v452
        %vm476 = vcmp.gt.f32.partialorder %v371, %v452
        %vm477 = vcmp.gt.f32.partialorder %v372, %v452
        %vm478 = vcmp.gt.f32.partialorder %v373, %v452
        %vm479 = vcmp.gt.f32.partialorder %v374, %v452
        %vm480 = vcmp.gt.f32.partialorder %v375, %v452
        %vm481 = vcmp.gt.f32.partialorder %v376, %v452
        %vm482 = vcmp.gt.f32.partialorder %v377, %v452
        %vm483 = vcmp.gt.f32.partialorder %v378, %v452
        %vm484 = vcmp.gt.f32.partialorder %v379, %v452
        %vm485 = vcmp.gt.f32.partialorder %v380, %v452
        %vm486 = vcmp.gt.f32.partialorder %v381, %v452
        %vm487 = vcmp.gt.f32.partialorder %v382, %v452
        %vm488 = vcmp.gt.f32.partialorder %v383, %v452
        %vm489 = vcmp.gt.f32.partialorder %v384, %v452
        %vm490 = vcmp.gt.f32.partialorder %v385, %v452
        %vm491 = vcmp.gt.f32.partialorder %v386, %v452
        %vm492 = vcmp.gt.f32.partialorder %v387, %v452
        %vm493 = vcmp.gt.f32.partialorder %v388, %v452
        %vm494 = vcmp.gt.f32.partialorder %v389, %v452
        %vm495 = vcmp.gt.f32.partialorder %v390, %v452
        %vm496 = vcmp.gt.f32.partialorder %v391, %v452
        %vm497 = vcmp.gt.f32.partialorder %v392, %v452
        %vm498 = vcmp.gt.f32.partialorder %v393, %v452
        %vm499 = vcmp.gt.f32.partialorder %v394, %v452
        %vm500 = vcmp.gt.f32.partialorder %v395, %v452
        %vm501 = vcmp.gt.f32.partialorder %v396, %v452
        %vm502 = vcmp.gt.f32.partialorder %v397, %v452
        %vm503 = vcmp.gt.f32.partialorder %v398, %v452
        %vm504 = vcmp.gt.f32.partialorder %v399, %v452
        %vm505 = vcmp.gt.f32.partialorder %v400, %v452
        %vm506 = vcmp.gt.f32.partialorder %v401, %v452
        %vm507 = vcmp.gt.f32.partialorder %v402, %v452
        %vm508 = vcmp.gt.f32.partialorder %v403, %v452
        %vm509 = vcmp.gt.f32.partialorder %v404, %v452
        %vm510 = vcmp.gt.f32.partialorder %v405, %v452
        %vm511 = vcmp.gt.f32.partialorder %v406, %v452
        %vm512 = vcmp.gt.f32.partialorder %v407, %v452
        %vm513 = vcmp.gt.f32.partialorder %v408, %v452
        %vm514 = vcmp.gt.f32.partialorder %v409, %v452
        %vm515 = vcmp.gt.f32.partialorder %v410, %v452
        %vm516 = vcmp.gt.f32.partialorder %v411, %v452
        %vm517 = vcmp.gt.f32.partialorder %v412, %v452
        %vm518 = vcmp.gt.f32.partialorder %v413, %v452
        %vm519 = vcmp.gt.f32.partialorder %v414, %v452
        %vm520 = vcmp.gt.f32.partialorder %v415, %v452
        %vm521 = vcmp.gt.f32.partialorder %v416, %v452
        %vm522 = vcmp.gt.f32.partialorder %v417, %v452
        %vm523 = vcmp.gt.f32.partialorder %v418, %v452
        %vm524 = vcmp.gt.f32.partialorder %v419, %v452
        %vm525 = vcmp.gt.f32.partialorder %v420, %v452
        %vm526 = vcmp.gt.f32.partialorder %v421, %v452
        %vm527 = vcmp.gt.f32.partialorder %v422, %v452
        %vm528 = vcmp.gt.f32.partialorder %v423, %v452
        %vm529 = vcmp.gt.f32.partialorder %v424, %v452
        %vm530 = vcmp.gt.f32.partialorder %v425, %v452
        %vm531 = vcmp.gt.f32.partialorder %v426, %v452
        %vm532 = vcmp.gt.f32.partialorder %v427, %v452
        %vm533 = vcmp.gt.f32.partialorder %v428, %v452
        %vm534 = vcmp.gt.f32.partialorder %v429, %v452
        %vm535 = vcmp.gt.f32.partialorder %v430, %v452
        %vm536 = vcmp.gt.f32.partialorder %v431, %v452
        %vm537 = vcmp.gt.f32.partialorder %v432, %v452
        %vm538 = vcmp.gt.f32.partialorder %v433, %v452
        %vm539 = vcmp.gt.f32.partialorder %v434, %v452
        %vm540 = vcmp.gt.f32.partialorder %v435, %v452
        %vm541 = vcmp.gt.f32.partialorder %v436, %v452
        %vm542 = vcmp.gt.f32.partialorder %v437, %v452
        %vm543 = vcmp.gt.f32.partialorder %v438, %v452
        %vm544 = vcmp.gt.f32.partialorder %v439, %v452
        %vm545 = vcmp.gt.f32.partialorder %v440, %v452
        %vm546 = vcmp.gt.f32.partialorder %v441, %v452
        %vm547 = vcmp.gt.f32.partialorder %v442, %v452
        %vm548 = vcmp.gt.f32.partialorder %v443, %v452
        %v549 = vstv %s445
        %v550 = vsel %vm453, %v549, %v451
        %v551 = vsel %vm454, %v549, %v451
        %v552 = vsel %vm455, %v549, %v451
        %v553 = vsel %vm456, %v549, %v451
        %v554 = vsel %vm457, %v549, %v451
        %v555 = vsel %vm458, %v549, %v451
        %v556 = vsel %vm459, %v549, %v451
        %v557 = vsel %vm460, %v549, %v451
        %v558 = vsel %vm461, %v549, %v451
        %v559 = vsel %vm462, %v549, %v451
        %v560 = vsel %vm463, %v549, %v451
        %v561 = vsel %vm464, %v549, %v451
        %v562 = vsel %vm465, %v549, %v451
        %v563 = vsel %vm466, %v549, %v451
        %v564 = vsel %vm467, %v549, %v451
        %v565 = vsel %vm468, %v549, %v451
        %v566 = vsel %vm469, %v549, %v451
        %v567 = vsel %vm470, %v549, %v451
        %v568 = vsel %vm471, %v549, %v451
        %v569 = vsel %vm472, %v549, %v451
        %v570 = vsel %vm473, %v549, %v451
        %v571 = vsel %vm474, %v549, %v451
        %v572 = vsel %vm475, %v549, %v451
        %v573 = vsel %vm476, %v549, %v451
        %v574 = vsel %vm477, %v549, %v451
        %v575 = vsel %vm478, %v549, %v451
        %v576 = vsel %vm479, %v549, %v451
        %v577 = vsel %vm480, %v549, %v451
        %v578 = vsel %vm481, %v549, %v451
        %v579 = vsel %vm482, %v549, %v451
        %v580 = vsel %vm483, %v549, %v451
        %v581 = vsel %vm484, %v549, %v451
        %v582 = vsel %vm485, %v549, %v451
        %v583 = vsel %vm486, %v549, %v451
        %v584 = vsel %vm487, %v549, %v451
        %v585 = vsel %vm488, %v549, %v451
        %v586 = vsel %vm489, %v549, %v451
        %v587 = vsel %vm490, %v549, %v451
        %v588 = vsel %vm491, %v549, %v451
        %v589 = vsel %vm492, %v549, %v451
        %v590 = vsel %vm493, %v549, %v451
        %v591 = vsel %vm494, %v549, %v451
        %v592 = vsel %vm495, %v549, %v451
        %v593 = vsel %vm496, %v549, %v451
        %v594 = vsel %vm497, %v549, %v451
        %v595 = vsel %vm498, %v549, %v451
        %v596 = vsel %vm499, %v549, %v451
        %v597 = vsel %vm500, %v549, %v451
        %v598 = vsel %vm501, %v549, %v451
        %v599 = vsel %vm502, %v549, %v451
        %v600 = vsel %vm503, %v549, %v451
        %v601 = vsel %vm504, %v549, %v451
        %v602 = vsel %vm505, %v549, %v451
        %v603 = vsel %vm506, %v549, %v451
        %v604 = vsel %vm507, %v549, %v451
        %v605 = vsel %vm508, %v549, %v451
        %v606 = vsel %vm509, %v549, %v451
        %v607 = vsel %vm510, %v549, %v451
        %v608 = vsel %vm511, %v549, %v451
        %v609 = vsel %vm512, %v549, %v451
        %v610 = vsel %vm513, %v549, %v451
        %v611 = vsel %vm514, %v549, %v451
        %v612 = vsel %vm515, %v549, %v451
        %v613 = vsel %vm516, %v549, %v451
        %v614 = vsel %vm517, %v549, %v451
        %v615 = vsel %vm518, %v549, %v451
        %v616 = vsel %vm519, %v549, %v451
        %v617 = vsel %vm520, %v549, %v451
        %v618 = vsel %vm521, %v549, %v451
        %v619 = vsel %vm522, %v549, %v451
        %v620 = vsel %vm523, %v549, %v451
        %v621 = vsel %vm524, %v549, %v451
        %v622 = vsel %vm525, %v549, %v451
        %v623 = vsel %vm526, %v549, %v451
        %v624 = vsel %vm527, %v549, %v451
        %v625 = vsel %vm528, %v549, %v451
        %v626 = vsel %vm529, %v549, %v451
        %v627 = vsel %vm530, %v549, %v451
        %v628 = vsel %vm531, %v549, %v451
        %v629 = vsel %vm532, %v549, %v451
        %v630 = vsel %vm533, %v549, %v451
        %v631 = vsel %vm534, %v549, %v451
        %v632 = vsel %vm535, %v549, %v451
        %v633 = vsel %vm536, %v549, %v451
        %v634 = vsel %vm537, %v549, %v451
        %v635 = vsel %vm538, %v549, %v451
        %v636 = vsel %vm539, %v549, %v451
        %v637 = vsel %vm540, %v549, %v451
        %v638 = vsel %vm541, %v549, %v451
        %v639 = vsel %vm542, %v549, %v451
        %v640 = vsel %vm543, %v549, %v451
        %v641 = vsel %vm544, %v549, %v451
        %v642 = vsel %vm545, %v549, %v451
        %v643 = vsel %vm546, %v549, %v451
        %v644 = vsel %vm547, %v549, %v451
        %v645 = vsel %vm548, %v549, %v451
        %v646 = vstv %s449
        %vm647 = vcmp.gt.f32.partialorder %v348, %v646
        %vm648 = vcmp.gt.f32.partialorder %v349, %v646
        %vm649 = vcmp.gt.f32.partialorder %v350, %v646
        %vm650 = vcmp.gt.f32.partialorder %v351, %v646
        %vm651 = vcmp.gt.f32.partialorder %v352, %v646
        %vm652 = vcmp.gt.f32.partialorder %v353, %v646
        %vm653 = vcmp.gt.f32.partialorder %v354, %v646
        %vm654 = vcmp.gt.f32.partialorder %v355, %v646
        %vm655 = vcmp.gt.f32.partialorder %v356, %v646
        %vm656 = vcmp.gt.f32.partialorder %v357, %v646
        %vm657 = vcmp.gt.f32.partialorder %v358, %v646
        %vm658 = vcmp.gt.f32.partialorder %v359, %v646
        %vm659 = vcmp.gt.f32.partialorder %v360, %v646
        %vm660 = vcmp.gt.f32.partialorder %v361, %v646
        %vm661 = vcmp.gt.f32.partialorder %v362, %v646
        %vm662 = vcmp.gt.f32.partialorder %v363, %v646
        %vm663 = vcmp.gt.f32.partialorder %v364, %v646
        %vm664 = vcmp.gt.f32.partialorder %v365, %v646
        %vm665 = vcmp.gt.f32.partialorder %v366, %v646
        %vm666 = vcmp.gt.f32.partialorder %v367, %v646
        %vm667 = vcmp.gt.f32.partialorder %v368, %v646
        %vm668 = vcmp.gt.f32.partialorder %v369, %v646
        %vm669 = vcmp.gt.f32.partialorder %v370, %v646
        %vm670 = vcmp.gt.f32.partialorder %v371, %v646
        %vm671 = vcmp.gt.f32.partialorder %v372, %v646
        %vm672 = vcmp.gt.f32.partialorder %v373, %v646
        %vm673 = vcmp.gt.f32.partialorder %v374, %v646
        %vm674 = vcmp.gt.f32.partialorder %v375, %v646
        %vm675 = vcmp.gt.f32.partialorder %v376, %v646
        %vm676 = vcmp.gt.f32.partialorder %v377, %v646
        %vm677 = vcmp.gt.f32.partialorder %v378, %v646
        %vm678 = vcmp.gt.f32.partialorder %v379, %v646
        %vm679 = vcmp.gt.f32.partialorder %v380, %v646
        %vm680 = vcmp.gt.f32.partialorder %v381, %v646
        %vm681 = vcmp.gt.f32.partialorder %v382, %v646
        %vm682 = vcmp.gt.f32.partialorder %v383, %v646
        %vm683 = vcmp.gt.f32.partialorder %v384, %v646
        %vm684 = vcmp.gt.f32.partialorder %v385, %v646
        %vm685 = vcmp.gt.f32.partialorder %v386, %v646
        %vm686 = vcmp.gt.f32.partialorder %v387, %v646
        %vm687 = vcmp.gt.f32.partialorder %v388, %v646
        %vm688 = vcmp.gt.f32.partialorder %v389, %v646
        %vm689 = vcmp.gt.f32.partialorder %v390, %v646
        %vm690 = vcmp.gt.f32.partialorder %v391, %v646
        %vm691 = vcmp.gt.f32.partialorder %v392, %v646
        %vm692 = vcmp.gt.f32.partialorder %v393, %v646
        %vm693 = vcmp.gt.f32.partialorder %v394, %v646
        %vm694 = vcmp.gt.f32.partialorder %v395, %v646
        %vm695 = vcmp.gt.f32.partialorder %v396, %v646
        %vm696 = vcmp.gt.f32.partialorder %v397, %v646
        %vm697 = vcmp.gt.f32.partialorder %v398, %v646
        %vm698 = vcmp.gt.f32.partialorder %v399, %v646
        %vm699 = vcmp.gt.f32.partialorder %v400, %v646
        %vm700 = vcmp.gt.f32.partialorder %v401, %v646
        %vm701 = vcmp.gt.f32.partialorder %v402, %v646
        %vm702 = vcmp.gt.f32.partialorder %v403, %v646
        %vm703 = vcmp.gt.f32.partialorder %v404, %v646
        %vm704 = vcmp.gt.f32.partialorder %v405, %v646
        %vm705 = vcmp.gt.f32.partialorder %v406, %v646
        %vm706 = vcmp.gt.f32.partialorder %v407, %v646
        %vm707 = vcmp.gt.f32.partialorder %v408, %v646
        %vm708 = vcmp.gt.f32.partialorder %v409, %v646
        %vm709 = vcmp.gt.f32.partialorder %v410, %v646
        %vm710 = vcmp.gt.f32.partialorder %v411, %v646
        %vm711 = vcmp.gt.f32.partialorder %v412, %v646
        %vm712 = vcmp.gt.f32.partialorder %v413, %v646
        %vm713 = vcmp.gt.f32.partialorder %v414, %v646
        %vm714 = vcmp.gt.f32.partialorder %v415, %v646
        %vm715 = vcmp.gt.f32.partialorder %v416, %v646
        %vm716 = vcmp.gt.f32.partialorder %v417, %v646
        %vm717 = vcmp.gt.f32.partialorder %v418, %v646
        %vm718 = vcmp.gt.f32.partialorder %v419, %v646
        %vm719 = vcmp.gt.f32.partialorder %v420, %v646
        %vm720 = vcmp.gt.f32.partialorder %v421, %v646
        %vm721 = vcmp.gt.f32.partialorder %v422, %v646
        %vm722 = vcmp.gt.f32.partialorder %v423, %v646
        %vm723 = vcmp.gt.f32.partialorder %v424, %v646
        %vm724 = vcmp.gt.f32.partialorder %v425, %v646
        %vm725 = vcmp.gt.f32.partialorder %v426, %v646
        %vm726 = vcmp.gt.f32.partialorder %v427, %v646
        %vm727 = vcmp.gt.f32.partialorder %v428, %v646
        %vm728 = vcmp.gt.f32.partialorder %v429, %v646
        %vm729 = vcmp.gt.f32.partialorder %v430, %v646
        %vm730 = vcmp.gt.f32.partialorder %v431, %v646
        %vm731 = vcmp.gt.f32.partialorder %v432, %v646
        %vm732 = vcmp.gt.f32.partialorder %v433, %v646
        %vm733 = vcmp.gt.f32.partialorder %v434, %v646
        %vm734 = vcmp.gt.f32.partialorder %v435, %v646
        %vm735 = vcmp.gt.f32.partialorder %v436, %v646
        %vm736 = vcmp.gt.f32.partialorder %v437, %v646
        %vm737 = vcmp.gt.f32.partialorder %v438, %v646
        %vm738 = vcmp.gt.f32.partialorder %v439, %v646
        %vm739 = vcmp.gt.f32.partialorder %v440, %v646
        %vm740 = vcmp.gt.f32.partialorder %v441, %v646
        %vm741 = vcmp.gt.f32.partialorder %v442, %v646
        %vm742 = vcmp.gt.f32.partialorder %v443, %v646
        %v743 = vstv %s446
        %v744 = vsel %vm647, %v743, %v550
        %v745 = vsel %vm648, %v743, %v551
        %v746 = vsel %vm649, %v743, %v552
        %v747 = vsel %vm650, %v743, %v553
        %v748 = vsel %vm651, %v743, %v554
        %v749 = vsel %vm652, %v743, %v555
        %v750 = vsel %vm653, %v743, %v556
        %v751 = vsel %vm654, %v743, %v557
        %v752 = vsel %vm655, %v743, %v558
        %v753 = vsel %vm656, %v743, %v559
        %v754 = vsel %vm657, %v743, %v560
        %v755 = vsel %vm658, %v743, %v561
        %v756 = vsel %vm659, %v743, %v562
        %v757 = vsel %vm660, %v743, %v563
        %v758 = vsel %vm661, %v743, %v564
        %v759 = vsel %vm662, %v743, %v565
        %v760 = vsel %vm663, %v743, %v566
        %v761 = vsel %vm664, %v743, %v567
        %v762 = vsel %vm665, %v743, %v568
        %v763 = vsel %vm666, %v743, %v569
        %v764 = vsel %vm667, %v743, %v570
        %v765 = vsel %vm668, %v743, %v571
        %v766 = vsel %vm669, %v743, %v572
        %v767 = vsel %vm670, %v743, %v573
        %v768 = vsel %vm671, %v743, %v574
        %v769 = vsel %vm672, %v743, %v575
        %v770 = vsel %vm673, %v743, %v576
        %v771 = vsel %vm674, %v743, %v577
        %v772 = vsel %vm675, %v743, %v578
        %v773 = vsel %vm676, %v743, %v579
        %v774 = vsel %vm677, %v743, %v580
        %v775 = vsel %vm678, %v743, %v581
        %v776 = vsel %vm679, %v743, %v582
        %v777 = vsel %vm680, %v743, %v583
        %v778 = vsel %vm681, %v743, %v584
        %v779 = vsel %vm682, %v743, %v585
        %v780 = vsel %vm683, %v743, %v586
        %v781 = vsel %vm684, %v743, %v587
        %v782 = vsel %vm685, %v743, %v588
        %v783 = vsel %vm686, %v743, %v589
        %v784 = vsel %vm687, %v743, %v590
        %v785 = vsel %vm688, %v743, %v591
        %v786 = vsel %vm689, %v743, %v592
        %v787 = vsel %vm690, %v743, %v593
        %v788 = vsel %vm691, %v743, %v594
        %v789 = vsel %vm692, %v743, %v595
        %v790 = vsel %vm693, %v743, %v596
        %v791 = vsel %vm694, %v743, %v597
        %v792 = vsel %vm695, %v743, %v598
        %v793 = vsel %vm696, %v743, %v599
        %v794 = vsel %vm697, %v743, %v600
        %v795 = vsel %vm698, %v743, %v601
        %v796 = vsel %vm699, %v743, %v602
        %v797 = vsel %vm700, %v743, %v603
        %v798 = vsel %vm701, %v743, %v604
        %v799 = vsel %vm702, %v743, %v605
        %v800 = vsel %vm703, %v743, %v606
        %v801 = vsel %vm704, %v743, %v607
        %v802 = vsel %vm705, %v743, %v608
        %v803 = vsel %vm706, %v743, %v609
        %v804 = vsel %vm707, %v743, %v610
        %v805 = vsel %vm708, %v743, %v611
        %v806 = vsel %vm709, %v743, %v612
        %v807 = vsel %vm710, %v743, %v613
        %v808 = vsel %vm711, %v743, %v614
        %v809 = vsel %vm712, %v743, %v615
        %v810 = vsel %vm713, %v743, %v616
        %v811 = vsel %vm714, %v743, %v617
        %v812 = vsel %vm715, %v743, %v618
        %v813 = vsel %vm716, %v743, %v619
        %v814 = vsel %vm717, %v743, %v620
        %v815 = vsel %vm718, %v743, %v621
        %v816 = vsel %vm719, %v743, %v622
        %v817 = vsel %vm720, %v743, %v623
        %v818 = vsel %vm721, %v743, %v624
        %v819 = vsel %vm722, %v743, %v625
        %v820 = vsel %vm723, %v743, %v626
        %v821 = vsel %vm724, %v743, %v627
        %v822 = vsel %vm725, %v743, %v628
        %v823 = vsel %vm726, %v743, %v629
        %v824 = vsel %vm727, %v743, %v630
        %v825 = vsel %vm728, %v743, %v631
        %v826 = vsel %vm729, %v743, %v632
        %v827 = vsel %vm730, %v743, %v633
        %v828 = vsel %vm731, %v743, %v634
        %v829 = vsel %vm732, %v743, %v635
        %v830 = vsel %vm733, %v743, %v636
        %v831 = vsel %vm734, %v743, %v637
        %v832 = vsel %vm735, %v743, %v638
        %v833 = vsel %vm736, %v743, %v639
        %v834 = vsel %vm737, %v743, %v640
        %v835 = vsel %vm738, %v743, %v641
        %v836 = vsel %vm739, %v743, %v642
        %v837 = vsel %vm740, %v743, %v643
        %v838 = vsel %vm741, %v743, %v644
        %v839 = vsel %vm742, %v743, %v645
        %v840 = vstv %s450
        %vm841 = vcmp.gt.f32.partialorder %v348, %v840
        %vm842 = vcmp.gt.f32.partialorder %v349, %v840
        %vm843 = vcmp.gt.f32.partialorder %v350, %v840
        %vm844 = vcmp.gt.f32.partialorder %v351, %v840
        %vm845 = vcmp.gt.f32.partialorder %v352, %v840
        %vm846 = vcmp.gt.f32.partialorder %v353, %v840
        %vm847 = vcmp.gt.f32.partialorder %v354, %v840
        %vm848 = vcmp.gt.f32.partialorder %v355, %v840
        %vm849 = vcmp.gt.f32.partialorder %v356, %v840
        %vm850 = vcmp.gt.f32.partialorder %v357, %v840
        %vm851 = vcmp.gt.f32.partialorder %v358, %v840
        %vm852 = vcmp.gt.f32.partialorder %v359, %v840
        %vm853 = vcmp.gt.f32.partialorder %v360, %v840
        %vm854 = vcmp.gt.f32.partialorder %v361, %v840
        %vm855 = vcmp.gt.f32.partialorder %v362, %v840
        %vm856 = vcmp.gt.f32.partialorder %v363, %v840
        %vm857 = vcmp.gt.f32.partialorder %v364, %v840
        %vm858 = vcmp.gt.f32.partialorder %v365, %v840
        %vm859 = vcmp.gt.f32.partialorder %v366, %v840
        %vm860 = vcmp.gt.f32.partialorder %v367, %v840
        %vm861 = vcmp.gt.f32.partialorder %v368, %v840
        %vm862 = vcmp.gt.f32.partialorder %v369, %v840
        %vm863 = vcmp.gt.f32.partialorder %v370, %v840
        %vm864 = vcmp.gt.f32.partialorder %v371, %v840
        %vm865 = vcmp.gt.f32.partialorder %v372, %v840
        %vm866 = vcmp.gt.f32.partialorder %v373, %v840
        %vm867 = vcmp.gt.f32.partialorder %v374, %v840
        %vm868 = vcmp.gt.f32.partialorder %v375, %v840
        %vm869 = vcmp.gt.f32.partialorder %v376, %v840
        %vm870 = vcmp.gt.f32.partialorder %v377, %v840
        %vm871 = vcmp.gt.f32.partialorder %v378, %v840
        %vm872 = vcmp.gt.f32.partialorder %v379, %v840
        %vm873 = vcmp.gt.f32.partialorder %v380, %v840
        %vm874 = vcmp.gt.f32.partialorder %v381, %v840
        %vm875 = vcmp.gt.f32.partialorder %v382, %v840
        %vm876 = vcmp.gt.f32.partialorder %v383, %v840
        %vm877 = vcmp.gt.f32.partialorder %v384, %v840
        %vm878 = vcmp.gt.f32.partialorder %v385, %v840
        %vm879 = vcmp.gt.f32.partialorder %v386, %v840
        %vm880 = vcmp.gt.f32.partialorder %v387, %v840
        %vm881 = vcmp.gt.f32.partialorder %v388, %v840
        %vm882 = vcmp.gt.f32.partialorder %v389, %v840
        %vm883 = vcmp.gt.f32.partialorder %v390, %v840
        %vm884 = vcmp.gt.f32.partialorder %v391, %v840
        %vm885 = vcmp.gt.f32.partialorder %v392, %v840
        %vm886 = vcmp.gt.f32.partialorder %v393, %v840
        %vm887 = vcmp.gt.f32.partialorder %v394, %v840
        %vm888 = vcmp.gt.f32.partialorder %v395, %v840
        %vm889 = vcmp.gt.f32.partialorder %v396, %v840
        %vm890 = vcmp.gt.f32.partialorder %v397, %v840
        %vm891 = vcmp.gt.f32.partialorder %v398, %v840
        %vm892 = vcmp.gt.f32.partialorder %v399, %v840
        %vm893 = vcmp.gt.f32.partialorder %v400, %v840
        %vm894 = vcmp.gt.f32.partialorder %v401, %v840
        %vm895 = vcmp.gt.f32.partialorder %v402, %v840
        %vm896 = vcmp.gt.f32.partialorder %v403, %v840
        %vm897 = vcmp.gt.f32.partialorder %v404, %v840
        %vm898 = vcmp.gt.f32.partialorder %v405, %v840
        %vm899 = vcmp.gt.f32.partialorder %v406, %v840
        %vm900 = vcmp.gt.f32.partialorder %v407, %v840
        %vm901 = vcmp.gt.f32.partialorder %v408, %v840
        %vm902 = vcmp.gt.f32.partialorder %v409, %v840
        %vm903 = vcmp.gt.f32.partialorder %v410, %v840
        %vm904 = vcmp.gt.f32.partialorder %v411, %v840
        %vm905 = vcmp.gt.f32.partialorder %v412, %v840
        %vm906 = vcmp.gt.f32.partialorder %v413, %v840
        %vm907 = vcmp.gt.f32.partialorder %v414, %v840
        %vm908 = vcmp.gt.f32.partialorder %v415, %v840
        %vm909 = vcmp.gt.f32.partialorder %v416, %v840
        %vm910 = vcmp.gt.f32.partialorder %v417, %v840
        %vm911 = vcmp.gt.f32.partialorder %v418, %v840
        %vm912 = vcmp.gt.f32.partialorder %v419, %v840
        %vm913 = vcmp.gt.f32.partialorder %v420, %v840
        %vm914 = vcmp.gt.f32.partialorder %v421, %v840
        %vm915 = vcmp.gt.f32.partialorder %v422, %v840
        %vm916 = vcmp.gt.f32.partialorder %v423, %v840
        %vm917 = vcmp.gt.f32.partialorder %v424, %v840
        %vm918 = vcmp.gt.f32.partialorder %v425, %v840
        %vm919 = vcmp.gt.f32.partialorder %v426, %v840
        %vm920 = vcmp.gt.f32.partialorder %v427, %v840
        %vm921 = vcmp.gt.f32.partialorder %v428, %v840
        %vm922 = vcmp.gt.f32.partialorder %v429, %v840
        %vm923 = vcmp.gt.f32.partialorder %v430, %v840
        %vm924 = vcmp.gt.f32.partialorder %v431, %v840
        %vm925 = vcmp.gt.f32.partialorder %v432, %v840
        %vm926 = vcmp.gt.f32.partialorder %v433, %v840
        %vm927 = vcmp.gt.f32.partialorder %v434, %v840
        %vm928 = vcmp.gt.f32.partialorder %v435, %v840
        %vm929 = vcmp.gt.f32.partialorder %v436, %v840
        %vm930 = vcmp.gt.f32.partialorder %v437, %v840
        %vm931 = vcmp.gt.f32.partialorder %v438, %v840
        %vm932 = vcmp.gt.f32.partialorder %v439, %v840
        %vm933 = vcmp.gt.f32.partialorder %v440, %v840
        %vm934 = vcmp.gt.f32.partialorder %v441, %v840
        %vm935 = vcmp.gt.f32.partialorder %v442, %v840
        %vm936 = vcmp.gt.f32.partialorder %v443, %v840
        %v937 = vstv %s447
        %v938 = vsel %vm841, %v937, %v744
        %v939 = vsel %vm842, %v937, %v745
        %v940 = vsel %vm843, %v937, %v746
        %v941 = vsel %vm844, %v937, %v747
        %v942 = vsel %vm845, %v937, %v748
        %v943 = vsel %vm846, %v937, %v749
        %v944 = vsel %vm847, %v937, %v750
        %v945 = vsel %vm848, %v937, %v751
        %v946 = vsel %vm849, %v937, %v752
        %v947 = vsel %vm850, %v937, %v753
        %v948 = vsel %vm851, %v937, %v754
        %v949 = vsel %vm852, %v937, %v755
        %v950 = vsel %vm853, %v937, %v756
        %v951 = vsel %vm854, %v937, %v757
        %v952 = vsel %vm855, %v937, %v758
        %v953 = vsel %vm856, %v937, %v759
        %v954 = vsel %vm857, %v937, %v760
        %v955 = vsel %vm858, %v937, %v761
        %v956 = vsel %vm859, %v937, %v762
        %v957 = vsel %vm860, %v937, %v763
        %v958 = vsel %vm861, %v937, %v764
        %v959 = vsel %vm862, %v937, %v765
        %v960 = vsel %vm863, %v937, %v766
        %v961 = vsel %vm864, %v937, %v767
        %v962 = vsel %vm865, %v937, %v768
        %v963 = vsel %vm866, %v937, %v769
        %v964 = vsel %vm867, %v937, %v770
        %v965 = vsel %vm868, %v937, %v771
        %v966 = vsel %vm869, %v937, %v772
        %v967 = vsel %vm870, %v937, %v773
        %v968 = vsel %vm871, %v937, %v774
        %v969 = vsel %vm872, %v937, %v775
        %v970 = vsel %vm873, %v937, %v776
        %v971 = vsel %vm874, %v937, %v777
        %v972 = vsel %vm875, %v937, %v778
        %v973 = vsel %vm876, %v937, %v779
        %v974 = vsel %vm877, %v937, %v780
        %v975 = vsel %vm878, %v937, %v781
        %v976 = vsel %vm879, %v937, %v782
        %v977 = vsel %vm880, %v937, %v783
        %v978 = vsel %vm881, %v937, %v784
        %v979 = vsel %vm882, %v937, %v785
        %v980 = vsel %vm883, %v937, %v786
        %v981 = vsel %vm884, %v937, %v787
        %v982 = vsel %vm885, %v937, %v788
        %v983 = vsel %vm886, %v937, %v789
        %v984 = vsel %vm887, %v937, %v790
        %v985 = vsel %vm888, %v937, %v791
        %v986 = vsel %vm889, %v937, %v792
        %v987 = vsel %vm890, %v937, %v793
        %v988 = vsel %vm891, %v937, %v794
        %v989 = vsel %vm892, %v937, %v795
        %v990 = vsel %vm893, %v937, %v796
        %v991 = vsel %vm894, %v937, %v797
        %v992 = vsel %vm895, %v937, %v798
        %v993 = vsel %vm896, %v937, %v799
        %v994 = vsel %vm897, %v937, %v800
        %v995 = vsel %vm898, %v937, %v801
        %v996 = vsel %vm899, %v937, %v802
        %v997 = vsel %vm900, %v937, %v803
        %v998 = vsel %vm901, %v937, %v804
        %v999 = vsel %vm902, %v937, %v805
        %v1000 = vsel %vm903, %v937, %v806
        %v1001 = vsel %vm904, %v937, %v807
        %v1002 = vsel %vm905, %v937, %v808
        %v1003 = vsel %vm906, %v937, %v809
        %v1004 = vsel %vm907, %v937, %v810
        %v1005 = vsel %vm908, %v937, %v811
        %v1006 = vsel %vm909, %v937, %v812
        %v1007 = vsel %vm910, %v937, %v813
        %v1008 = vsel %vm911, %v937, %v814
        %v1009 = vsel %vm912, %v937, %v815
        %v1010 = vsel %vm913, %v937, %v816
        %v1011 = vsel %vm914, %v937, %v817
        %v1012 = vsel %vm915, %v937, %v818
        %v1013 = vsel %vm916, %v937, %v819
        %v1014 = vsel %vm917, %v937, %v820
        %v1015 = vsel %vm918, %v937, %v821
        %v1016 = vsel %vm919, %v937, %v822
        %v1017 = vsel %vm920, %v937, %v823
        %v1018 = vsel %vm921, %v937, %v824
        %v1019 = vsel %vm922, %v937, %v825
        %v1020 = vsel %vm923, %v937, %v826
        %v1021 = vsel %vm924, %v937, %v827
        %v1022 = vsel %vm925, %v937, %v828
        %v1023 = vsel %vm926, %v937, %v829
        %v1024 = vsel %vm927, %v937, %v830
        %v1025 = vsel %vm928, %v937, %v831
        %v1026 = vsel %vm929, %v937, %v832
        %v1027 = vsel %vm930, %v937, %v833
        %v1028 = vsel %vm931, %v937, %v834
        %v1029 = vsel %vm932, %v937, %v835
        %v1030 = vsel %vm933, %v937, %v836
        %v1031 = vsel %vm934, %v937, %v837
        %v1032 = vsel %vm935, %v937, %v838
        %v1033 = vsel %vm936, %v937, %v839
        %v1034 = vld [vmem:[#allocation9] sm:$0xff]
        %v1035 = vld [vmem:[#allocation9 + $0x8] sm:$0xff]
        %v1036 = vld [vmem:[#allocation9 + $0x10] sm:$0xff]
        %v1037 = vld [vmem:[#allocation2] sm:$0xff]
        %v1038 = vld [vmem:[#allocation2 + $0x8] sm:$0xff]
        %1039 = vmatprep.subr.mxu0 %v984
        %1040 = vmatpush1.xpose.msra.mxu0 %v983
        %1041 = vmatprep.subr.mxu0 %v981
        %1042 = vmatpush1.xpose.msra.mxu0 %v980
        %1043 = vmatprep.subr.mxu0 %v978
        %1044 = vmatpush1.xpose.msra.mxu0 %v977
        %1045 = vmatprep.subr.mxu0 %v975
        %1046 = vmatpush1.xpose.msra.mxu0 %v974
        %1047 = vmatprep.subr.mxu0 %v972
        %1048 = vmatpush1.xpose.msra.mxu0 %v971
        %1049 = vmatprep.subr.mxu0 %v969
        %1050 = vmatpush1.xpose.msra.mxu0 %v968
        %1051 = vmatprep.subr.mxu0 %v966
        %1052 = vmatpush1.xpose.msra.mxu0 %v965
        %1053 = vmatprep.subr.mxu0 %v963
        %1054 = vmatpush1.xpose.msra.mxu0 %v962
        %1055 = vmatprep.subr.mxu0 %v960
        %1056 = vmatpush1.xpose.msra.mxu0 %v959
        %1057 = vmatprep.subr.mxu0 %v957
        %1058 = vmatpush1.xpose.msra.mxu0 %v956
        %1059 = vmatprep.subr.mxu0 %v954
        %1060 = vmatpush1.xpose.msra.mxu0 %v953
        %1061 = vmatprep.subr.mxu0 %v951
        %1062 = vmatpush1.xpose.msra.mxu0 %v950
        %1063 = vmatprep.subr.mxu0 %v948
        %1064 = vmatpush1.xpose.msra.mxu0 %v947
        %1065 = vmatprep.subr.mxu0 %v945
        %1066 = vmatpush1.xpose.msra.mxu0 %v944
        %1067 = vmatprep.subr.mxu0 %v942
        %1068 = vmatpush1.xpose.msra.mxu0 %v941
        %1069 = vmatprep.subr.mxu0 %v939
        %1070 = vmatpush1.xpose.msra.mxu0 %v938
        %1071 = vmatprep.subr.mxu0 %v1032
        %1072 = vmatpush2.xpose.msra.mxu0 %v1031
        %1073 = vmatprep.subr.mxu0 %v1029
        %1074 = vmatpush2.xpose.msra.mxu0 %v1028
        %1075 = vmatprep.subr.mxu0 %v1026
        %1076 = vmatpush2.xpose.msra.mxu0 %v1025
        %1077 = vmatprep.subr.mxu0 %v1023
        %1078 = vmatpush2.xpose.msra.mxu0 %v1022
        %1079 = vmatprep.subr.mxu0 %v1020
        %1080 = vmatpush2.xpose.msra.mxu0 %v1019
        %1081 = vmatprep.subr.mxu0 %v1017
        %1082 = vmatpush2.xpose.msra.mxu0 %v1016
        %1083 = vmatprep.subr.mxu0 %v1014
        %1084 = vmatpush2.xpose.msra.mxu0 %v1013
        %1085 = vmatprep.subr.mxu0 %v1011
        %1086 = vmatpush2.xpose.msra.mxu0 %v1010
        %1087 = vmatprep.subr.mxu0 %v1008
        %1088 = vmatpush2.xpose.msra.mxu0 %v1007
        %1089 = vmatprep.subr.mxu0 %v1005
        %1090 = vmatpush2.xpose.msra.mxu0 %v1004
        %1091 = vmatprep.subr.mxu0 %v1002
        %1092 = vmatpush2.xpose.msra.mxu0 %v1001
        %1093 = vmatprep.subr.mxu0 %v999
        %1094 = vmatpush2.xpose.msra.mxu0 %v998
        %1095 = vmatprep.subr.mxu0 %v996
        %1096 = vmatpush2.xpose.msra.mxu0 %v995
        %1097 = vmatprep.subr.mxu0 %v993
        %1098 = vmatpush2.xpose.msra.mxu0 %v992
        %1099 = vmatprep.subr.mxu0 %v990
        %1100 = vmatpush2.xpose.msra.mxu0 %v989
        %1101 = vmatprep.subr.mxu0 %v987
        %1102 = vmatpush2.xpose.msra.mxu0 %v986
        %1103 = vmatprep.mubr.f32.mxu0 %v1035
        %1104 = vmatmul.mubr.f32.gmra.mxu0 %v1034
        %v1105 = vpop.f32.mrf.mxu0
        %v1106 = vadd.f32 0.0, %v1105
        %v1107 = vpop.f32.mrf.mxu0
        %v1108 = vadd.f32 0.0, %v1107
        %1109 = vdwg.mxu0
        %1110 = vmatprep.subr.mxu0 0.0
        %1111 = vmatpush1.xpose.msra.mxu0 %v985
        %1112 = vmatprep.subr.mxu0 0.0
        %1113 = vmatpush1.xpose.msra.mxu0 %v982
        %1114 = vmatprep.subr.mxu0 0.0
        %1115 = vmatpush1.xpose.msra.mxu0 %v979
        %1116 = vmatprep.subr.mxu0 0.0
        %1117 = vmatpush1.xpose.msra.mxu0 %v976
        %1118 = vmatprep.subr.mxu0 0.0
        %1119 = vmatpush1.xpose.msra.mxu0 %v973
        %1120 = vmatprep.subr.mxu0 0.0
        %1121 = vmatpush1.xpose.msra.mxu0 %v970
        %1122 = vmatprep.subr.mxu0 0.0
        %1123 = vmatpush1.xpose.msra.mxu0 %v967
        %1124 = vmatprep.subr.mxu0 0.0
        %1125 = vmatpush1.xpose.msra.mxu0 %v964
        %1126 = vmatprep.subr.mxu0 0.0
        %1127 = vmatpush1.xpose.msra.mxu0 %v961
        %1128 = vmatprep.subr.mxu0 0.0
        %1129 = vmatpush1.xpose.msra.mxu0 %v958
        %1130 = vmatprep.subr.mxu0 0.0
        %1131 = vmatpush1.xpose.msra.mxu0 %v955
        %1132 = vmatprep.subr.mxu0 0.0
        %1133 = vmatpush1.xpose.msra.mxu0 %v952
        %1134 = vmatprep.subr.mxu0 0.0
        %1135 = vmatpush1.xpose.msra.mxu0 %v949
        %1136 = vmatprep.subr.mxu0 0.0
        %1137 = vmatpush1.xpose.msra.mxu0 %v946
        %1138 = vmatprep.subr.mxu0 0.0
        %1139 = vmatpush1.xpose.msra.mxu0 %v943
        %1140 = vmatprep.subr.mxu0 0.0
        %1141 = vmatpush1.xpose.msra.mxu0 %v940
        %1142 = vmatprep.subr.mxu0 0.0
        %1143 = vmatpush2.xpose.msra.mxu0 %v1033
        %1144 = vmatprep.subr.mxu0 0.0
        %1145 = vmatpush2.xpose.msra.mxu0 %v1030
        %1146 = vmatprep.subr.mxu0 0.0
        %1147 = vmatpush2.xpose.msra.mxu0 %v1027
        %1148 = vmatprep.subr.mxu0 0.0
        %1149 = vmatpush2.xpose.msra.mxu0 %v1024
        %1150 = vmatprep.subr.mxu0 0.0
        %1151 = vmatpush2.xpose.msra.mxu0 %v1021
        %1152 = vmatprep.subr.mxu0 0.0
        %1153 = vmatpush2.xpose.msra.mxu0 %v1018
        %1154 = vmatprep.subr.mxu0 0.0
        %1155 = vmatpush2.xpose.msra.mxu0 %v1015
        %1156 = vmatprep.subr.mxu0 0.0
        %1157 = vmatpush2.xpose.msra.mxu0 %v1012
        %1158 = vmatprep.subr.mxu0 0.0
        %1159 = vmatpush2.xpose.msra.mxu0 %v1009
        %1160 = vmatprep.subr.mxu0 0.0
        %1161 = vmatpush2.xpose.msra.mxu0 %v1006
        %1162 = vmatprep.subr.mxu0 0.0
        %1163 = vmatpush2.xpose.msra.mxu0 %v1003
        %1164 = vmatprep.subr.mxu0 0.0
        %1165 = vmatpush2.xpose.msra.mxu0 %v1000
        %1166 = vmatprep.subr.mxu0 0.0
        %1167 = vmatpush2.xpose.msra.mxu0 %v997
        %1168 = vmatprep.subr.mxu0 0.0
        %1169 = vmatpush2.xpose.msra.mxu0 %v994
        %1170 = vmatprep.subr.mxu0 0.0
        %1171 = vmatpush2.xpose.msra.mxu0 %v991
        %1172 = vmatprep.subr.mxu0 0.0
        %1173 = vmatpush2.xpose.msra.mxu0 %v988
        %1174 = vmatprep.mubr.f32.mxu0 0.0
        %1175 = vmatmul.mubr.f32.gmra.mxu0 %v1036
        %v1176 = vpop.f32.mrf.mxu0
        %v1177 = vadd.f32 %v1106, %v1176
        %v1178 = vpop.f32.mrf.mxu0
        %v1179 = vadd.f32 %v1108, %v1178
        %1180 = vdwg.mxu0
        %v1181 = vadd.f32 %v1037, %v1177
        %v1182 = vadd.f32 %v1038, %v1179
        %1183 = vst [vmem:[#allocation2] sm:$0xff] %v1181
        %1184 = vst [vmem:[#allocation2 + $0x8] sm:$0xff] %v1182
        // Predicated region
        $region61: #{tpu_custom_call.1} parent=39 // pred_check
          %p1185 = pneg %p342
        $region62: #{tpu_custom_call.1} parent=39 // pred_check_branch
          %1187 = sbr.rel (%p1185) target = $region64
        $region63: #{tpu_custom_call.1} parent=39 // pred_region
          %v1188 = vld [vmem:[#allocation2] sm:$0xff]
          %v1189 = vld [vmem:[#allocation2 + $0x8] sm:$0xff]
          %v1190 = vld [vmem:[%s339] sm:$0x3]
          %v1192 = vlaneseq
          %v1193 = vshrl.u32 %v1192, 7
          %v1194 = vsub.s32 0, %v1193
          %v1195 = vrot.slane %v1190, %v1194
          %v1196 = vlaneseq
          %v1197 = vshrl.u32 %v1196, 7
          %v1198 = vsub.s32 1, %v1197
          %v1199 = vrot.slane %v1190, %v1198
          %v1202 = vadd.f32 %v1188, %v1195
          %v1203 = vadd.f32 %v1189, %v1199
          %1204 = vst [vmem:[%s332] sm:$0xff] %v1202
          %1205 = vst [vmem:[%s332 + $0x8] sm:$0xff] %v1203
        $region64: #{tpu_custom_call.1} parent=39 // pred_fallthru
          _
        %s1206 = sand.u32 %s178, 1
        %s1207 = scalar_lea.sflag [#allocation5], %s1206
        %s1208 = sand.u32 %s178, 1
        %s1209 = smul.addr %s1208, 16
        %s1210 = scalar_lea.vmem [#allocation12], %s1209
        // Predicated region
        $region65: #{tpu_custom_call.1} parent=39 // pred_check
          %p1211 = pneg %p188
        $region66: #{tpu_custom_call.1} parent=39 // pred_check_branch
          %1213 = sbr.rel (%p1211) target = $region68
        $region67: #{tpu_custom_call.1} parent=39 // pred_region
          %s1214 = smul.u32 2, %s30
          %s1216 = ssub.s32 256, 256
          %1217 = vsyncadd %s1207, %s1216
          %s1218 = smul.addr %s31, 4
          %s1219 = sadd.s32 %s1214, %s1218
          %s1220 = smul.addr %s1219, 128
          %s1221 = scalar_lea.hbm %s5, %s1220
          %s1223 = sshll.u32 %s1210, 4
          %s1224 = int_to_ptr.vmem [resolvable:$true] %s1223
          %1226 = dma.vmem_to_hbm [thread:$0]  %s1224, 256, %s1221, %s1207
        $region68: #{tpu_custom_call.1} parent=39 // pred_fallthru
          _
      $region40: #{tpu_custom_call.1} parent=5 // pred_fallthru
        _
      %p1227 = scmp.le.s32.totalorder 2, %s20
      // Predicated region
      $region69: #{tpu_custom_call.1} parent=5 // pred_check
        %p1228 = pneg %p1227
      $region70: #{tpu_custom_call.1} parent=5 // pred_check_branch
        %1230 = sbr.rel (%p1228) target = $region72
      $region71: #{tpu_custom_call.1} parent=5 // pred_region
        %s1231 = ssub.s32 %s20, 2
        // Predicated region
        $region73: #{tpu_custom_call.1} parent=71 // pred_check
          %p1232 = pneg %p194
        $region74: #{tpu_custom_call.1} parent=71 // pred_check_branch
          %1234 = sbr.rel (%p1232) target = $region76
        $region75: #{tpu_custom_call.1} parent=71 // pred_region
          %s1235 = sand.u32 %s179, 1
          %s1236 = scalar_lea.sflag [#allocation5], %s1235
          %s1237 = sand.u32 %s179, 1
          %s1238 = smul.addr %s1237, 16
          %s1239 = scalar_lea.vmem [#allocation12], %s1238
          %1240 = dma.done %s1236, 256
        $region76: #{tpu_custom_call.1} parent=71 // pred_fallthru
          _
      $region72: #{tpu_custom_call.1} parent=5 // pred_fallthru
        _
    $region6: #{tpu_custom_call.1} parent=1 // loop_footer
      %s24 = sadd.s32 1, %s20
    $region7: #{tpu_custom_call.1} parent=1 // loop_footer_branch
      %19 = sbr.rel target = $region3
    $region8: #{tpu_custom_call.1} parent=1 // loop_exit
      _
    %1241 = vsyncpa [#allocation4], 1
    %s1242 = scalar_lea.sflag [#allocation4], 1
    %1243 = vsyncpa %s1242, 1
    %1244 = vsyncpa [#allocation11], 1
    %s1245 = scalar_lea.sflag [#allocation11], 1
    %1246 = vsyncpa %s1245, 1
    %1247 = vsyncpa [#allocation5], 1
    %s1248 = scalar_lea.sflag [#allocation5], 1
    %1249 = vsyncpa %s1248, 1
    %1250 = vsyncpa [#allocation6], 1
    %s1251 = scalar_lea.sflag [#allocation6], 1
    %1252 = vsyncpa %s1251, 1
    %1253 = vsyncpa [#allocation7], 1
    %s1254 = scalar_lea.sflag [#allocation7], 1
    %1255 = vsyncpa %s1254, 1

</llo_original>
